<compile_context>
chip_gen: v7x
topology: tpu7x:2x2x1
jax: 0.10.0
libtpu: 0.0.40
codegen_flags: <defaults>
</compile_context>

<pallas_src>
import jax
import jax.numpy as jnp
import numpy as np
from jax import lax
from jax.experimental import pallas as pl
from jax.experimental.pallas import tpu as pltpu

GAMMA = 100.0          # self.gamma
INITIAL_V = 1.0        # self.initial_V
ACT_RATIO = 0.1        # self.act_ratio
_LOG_CLAMP = 1e-30     # clamp tanh before log so x==0 never yields (-inf * 0) = NaN in the MXU

# Contract on D_in of both operands (i.e. x @ w.T without materializing a transpose).
_NT_DIMS = (((1,), (1,)), ((), ()))


def _harsanyi_kernel(x_ref, w_ref, v_ref, out_ref, delta_ref):
    # x_ref:     (B, D_in)       full activations (same block every grid step)
    # w_ref:     (TILE_O, D_in)  fc weight tile
    # v_ref:     (TILE_O, D_in)  v weight tile
    # out_ref:   (B, TILE_O)
    # delta_ref: (B, TILE_O)
    x = x_ref[...].astype(jnp.float32)
    w = w_ref[...].astype(jnp.float32)
    v = v_ref[...].astype(jnp.float32)

    # StraightThroughEstimator forward: (v > 0).float()
    is_child = v > 0.0
    mask = is_child.astype(jnp.float32)                  # (TILE_O, D_in)
    masked_w = jnp.where(is_child, w, 0.0)               # single select, no extra multiply

    # y = x @ (W * mask)^T  -> MXU (NT dot_general, no explicit transpose)
    y = lax.dot_general(
        x, masked_w, _NT_DIMS,
        precision=lax.Precision.HIGHEST,
        preferred_element_type=jnp.float32,
    )                                                     # (B, TILE_O)

    # delta[b,o] = prod_j (mask[o,j]*t[b,j] + (1-mask[o,j]))
    #            = prod_{j: mask[o,j]=1} t[b,j]
    #            = exp( sum_j log(t[b,j]) * mask[o,j] )
    # -> one more MXU matmul + one EUP exp instead of a (B, TILE_O, D_in)
    #    broadcast and a cross-lane product reduction.
    t = jnp.tanh(GAMMA * jnp.abs(x))                      # (B, D_in)
    log_t = jnp.log(jnp.maximum(t, _LOG_CLAMP))           # clamp: avoid -inf * 0 NaN
    log_delta = lax.dot_general(
        log_t, mask, _NT_DIMS,
        precision=lax.Precision.HIGHEST,
        preferred_element_type=jnp.float32,
    )                                                     # (B, TILE_O)
    delta = jnp.exp(log_delta)

    out_ref[...] = jnp.maximum(y * delta, 0.0)            # relu(y * delta)
    delta_ref[...] = delta


def harsanyi_block_forward(x, fc_weight, v_weight, *, tile_o=256, vmem_limit_bytes=None):
    B, d_in = x.shape
    d_out, d_in_w = fc_weight.shape
    assert d_in == d_in_w and v_weight.shape == (d_out, d_in)

    tile_o = min(tile_o, d_out)
    assert d_out % tile_o == 0, "d_out must be divisible by tile_o"
    grid = (d_out // tile_o,)

    if vmem_limit_bytes is None:
        # 2 weight inputs x 2 pipeline buffers + x + 2 outputs x 2 buffers (f32),
        # with 2x headroom; stay at/below 48 MiB so v7x (64 MiB physical VMEM)
        # keeps double-buffering. Reduce tile_o for very large D_in.
        est = (2 * 2 * tile_o * d_in * 4
               + 2 * B * d_in * 4
               + 2 * 2 * B * tile_o * 4)
        vmem_limit_bytes = int(min(max(2 * est, 32 * 1024 * 1024), 48 * 1024 * 1024))

    out_shapes = (
        jax.ShapeDtypeStruct((B, d_out), jnp.float32),
        jax.ShapeDtypeStruct((B, d_out), jnp.float32),
    )
    return pl.pallas_call(
        _harsanyi_kernel,
        out_shape=out_shapes,
        grid=grid,
        in_specs=[
            pl.BlockSpec((B, d_in), lambda o: (0, 0)),        # x (full, reused per tile)
            pl.BlockSpec((tile_o, d_in), lambda o: (o, 0)),   # fc weight tile
            pl.BlockSpec((tile_o, d_in), lambda o: (o, 0)),   # v weight tile
        ],
        out_specs=(
            pl.BlockSpec((B, tile_o), lambda o: (0, o)),      # out   (lane-dense, tile_o % 128 == 0)
            pl.BlockSpec((B, tile_o), lambda o: (0, o)),      # delta
        ),
        compiler_params=pltpu.CompilerParams(
            dimension_semantics=("parallel",),                # v7x: 2 TCs split the D_out tiles
            vmem_limit_bytes=vmem_limit_bytes,
        ),
    )(x, fc_weight, v_weight)


def _init_params(key, input_dim, output_dim):
    """Deterministic synthetic init mirroring HarsanyiBlock.__init__."""
    kw, _ = jax.random.split(key)
    # xavier_uniform_ for fc.weight (bias=False)
    bound = float(np.sqrt(6.0 / (input_dim + output_dim)))
    fc_weight = jax.random.uniform(
        kw, (output_dim, input_dim), jnp.float32, minval=-bound, maxval=bound
    )
    # v.weight: all -initial_V, with act_ratio*input_dim random entries per row = +initial_V
    rng = np.random.default_rng(0)
    v_np = np.full((output_dim, input_dim), -INITIAL_V, dtype=np.float32)
    n_act = int(ACT_RATIO * input_dim)
    for i in range(output_dim):
        act_index = rng.choice(input_dim, n_act, replace=False)
        v_np[i, act_index] = INITIAL_V
    v_weight = jnp.asarray(v_np)
    return fc_weight, v_weight


def _reference(x, fc_weight, v_weight):
    """Pure-JAX reference of the torch forward (direct product form)."""
    mask = (v_weight > 0).astype(jnp.float32)
    y = lax.dot_general(x, fc_weight * mask, _NT_DIMS,
                        precision=lax.Precision.HIGHEST,
                        preferred_element_type=jnp.float32)
    t = jnp.tanh(GAMMA * jnp.abs(x))
    delta_en = mask[None, :, :] * t[:, None, :] + (1.0 - mask)[None, :, :]
    delta = jnp.prod(delta_en, axis=-1)
    return jnp.maximum(y * delta, 0.0), delta


if __name__ == "__main__":
    B, D_IN, D_OUT = 8, 128, 256   # grid = (2,) -> both v7x TensorCores get a tile

    key = jax.random.PRNGKey(0)
    kx, kp = jax.random.split(key)
    x = jax.random.normal(kx, (B, D_IN), dtype=jnp.float32)
    fc_weight, v_weight = _init_params(kp, D_IN, D_OUT)

    out, delta = harsanyi_block_forward(x, fc_weight, v_weight, tile_o=128)
    out = jax.block_until_ready(out)
    delta = jax.block_until_ready(delta)

    ref_out, ref_delta = _reference(x, fc_weight, v_weight)
    # exp(sum(log)) vs prod() differs at ~1e-6 relative; allow a slightly looser rtol.
    np.testing.assert_allclose(np.asarray(out), np.asarray(ref_out), rtol=1e-4, atol=1e-5)
    np.testing.assert_allclose(np.asarray(delta), np.asarray(ref_delta), rtol=1e-4, atol=1e-5)

    print("KERNEL_OK")
</pallas_src>

<mosaic_0001>
module attributes {stable_mosaic.version = 11 : i64} {
  func.func @_harsanyi_kernel(%arg0: i32, %arg1: memref<8x128xf32, #tpu.memory_space<vmem>>, %arg2: memref<128x128xf32, #tpu.memory_space<vmem>>, %arg3: memref<128x128xf32, #tpu.memory_space<vmem>>, %arg4: memref<8x128xf32, #tpu.memory_space<vmem>>, %arg5: memref<8x128xf32, #tpu.memory_space<vmem>>) attributes {dimension_semantics = [#tpu.dimension_semantics<parallel>], iteration_bounds = array<i64: 2>, scalar_prefetch = 0 : i64, scratch_operands = 0 : i64, tpu.core_type = #tpu.core_type<tc>, window_params = [{pipeline_mode = #tpu.pipeline_mode<synchronous>, transform_indices = @transform_0, window_bounds = array<i64: 8, 128>}, {transform_indices = @transform_1, window_bounds = array<i64: 128, 128>}, {transform_indices = @transform_2, window_bounds = array<i64: 128, 128>}, {transform_indices = @transform_3, window_bounds = array<i64: 8, 128>}, {transform_indices = @transform_4, window_bounds = array<i64: 8, 128>}]} {
    %c0 = arith.constant 0 : index
    %c0_0 = arith.constant 0 : index
    %0 = vector.load %arg1[%c0, %c0_0] : memref<8x128xf32, #tpu.memory_space<vmem>>, vector<8x128xf32>
    %c0_1 = arith.constant 0 : index
    %c0_2 = arith.constant 0 : index
    %1 = vector.load %arg2[%c0_1, %c0_2] : memref<128x128xf32, #tpu.memory_space<vmem>>, vector<128x128xf32>
    %c0_3 = arith.constant 0 : index
    %c0_4 = arith.constant 0 : index
    %2 = vector.load %arg3[%c0_3, %c0_4] : memref<128x128xf32, #tpu.memory_space<vmem>>, vector<128x128xf32>
    %cst = arith.constant 0.000000e+00 : f32
    %3 = vector.broadcast %cst : f32 to vector<128x128xf32>
    %4 = arith.cmpf ogt, %2, %3 : vector<128x128xf32>
    %5 = arith.extui %4 : vector<128x128xi1> to vector<128x128xi32>
    %6 = arith.sitofp %5 : vector<128x128xi32> to vector<128x128xf32>
    %cst_5 = arith.constant 0.000000e+00 : f32
    %7 = vector.broadcast %cst_5 : f32 to vector<128x128xf32>
    %8 = arith.select %4, %1, %7 : vector<128x128xi1>, vector<128x128xf32>
    %cst_6 = arith.constant dense<0.000000e+00> : vector<8x128xf32>
    %9 = tpu.matmul %0, %8, %cst_6 {dimension_numbers = #tpu.dot_dimension_numbers<[1], [1], [0], [0], [0, 0, 1, 0], [], []>, precision = #tpu.contract_precision<fp32>} : vector<8x128xf32>, vector<128x128xf32>, vector<8x128xf32> -> vector<8x128xf32>
    %10 = math.absf %0 : vector<8x128xf32>
    %cst_7 = arith.constant 1.000000e+02 : f32
    %11 = vector.broadcast %cst_7 : f32 to vector<8x128xf32>
    %12 = arith.mulf %11, %10 : vector<8x128xf32>
    %13 = math.tanh %12 : vector<8x128xf32>
    %cst_8 = arith.constant 1.000000e-30 : f32
    %14 = vector.broadcast %cst_8 : f32 to vector<8x128xf32>
    %15 = arith.maximumf %13, %14 : vector<8x128xf32>
    %16 = math.log %15 : vector<8x128xf32>
    %cst_9 = arith.constant dense<0.000000e+00> : vector<8x128xf32>
    %17 = tpu.matmul %16, %6, %cst_9 {dimension_numbers = #tpu.dot_dimension_numbers<[1], [1], [0], [0], [0, 0, 1, 0], [], []>, precision = #tpu.contract_precision<fp32>} : vector<8x128xf32>, vector<128x128xf32>, vector<8x128xf32> -> vector<8x128xf32>
    %18 = math.exp %17 : vector<8x128xf32>
    %19 = arith.mulf %9, %18 : vector<8x128xf32>
    %cst_10 = arith.constant 0.000000e+00 : f32
    %20 = vector.broadcast %cst_10 : f32 to vector<8x128xf32>
    %21 = arith.maximumf %19, %20 : vector<8x128xf32>
    %c0_11 = arith.constant 0 : index
    %c0_12 = arith.constant 0 : index
    %22 = vector.load %arg4[%c0_11, %c0_12] : memref<8x128xf32, #tpu.memory_space<vmem>>, vector<8x128xf32>
    tpu.vector_store %arg4[%c0_11, %c0_12], %21 {strides = array<i32>} : memref<8x128xf32, #tpu.memory_space<vmem>>, vector<8x128xf32>,
    %c0_13 = arith.constant 0 : index
    %c0_14 = arith.constant 0 : index
    %23 = vector.load %arg5[%c0_13, %c0_14] : memref<8x128xf32, #tpu.memory_space<vmem>>, vector<8x128xf32>
    tpu.vector_store %arg5[%c0_13, %c0_14], %18 {strides = array<i32>} : memref<8x128xf32, #tpu.memory_space<vmem>>, vector<8x128xf32>,
    return
  }
  func.func @transform_0(%arg0: i32) -> (i32, i32) {
    %c0_i32 = arith.constant 0 : i32
    %c0_i32_0 = arith.constant 0 : i32
    %c0_i32_1 = arith.constant 0 : i32
    return %c0_i32, %c0_i32_0 : i32, i32
  }
  func.func @transform_1(%arg0: i32) -> (i32, i32) {
    %c0_i32 = arith.constant 0 : i32
    %c0_i32_0 = arith.constant 0 : i32
    return %arg0, %c0_i32 : i32, i32
  }
  func.func @transform_2(%arg0: i32) -> (i32, i32) {
    %c0_i32 = arith.constant 0 : i32
    %c0_i32_0 = arith.constant 0 : i32
    return %arg0, %c0_i32 : i32, i32
  }
  func.func @transform_3(%arg0: i32) -> (i32, i32) {
    %c0_i32 = arith.constant 0 : i32
    %c0_i32_0 = arith.constant 0 : i32
    return %c0_i32, %arg0 : i32, i32
  }
  func.func @transform_4(%arg0: i32) -> (i32, i32) {
    %c0_i32 = arith.constant 0 : i32
    %c0_i32_0 = arith.constant 0 : i32
    return %c0_i32, %arg0 : i32, i32
  }
}

</mosaic_0001>

<llo_original>
// kernel: tpu_custom_call.1
$region0: #{tpu_custom_call.1}
  #allocation0 [shape = 'u32[]', space=smem, size = 0x4, offset = 0x4, fixed_abs, tag = 'smem constant byte address 0x4 - core index']
  #allocation1 [shape = 'u32[144,128]{1,0:T(1,128)}', space=vmem, size = 0x12000, scoped, tag = 'internal scratch']
  %s0 = inlined_call_operand.hbm [shape: f32[8,128], index: 0, kind: input, shape index: {}]
  %s1 = inlined_call_operand.hbm [shape: f32[256,128], index: 1, kind: input, shape index: {}]
  %s2 = inlined_call_operand.hbm [shape: f32[256,128], index: 2, kind: input, shape index: {}]
  %s3 = inlined_call_operand.hbm [shape: f32[8,256], index: 3, kind: output, shape index: {0}]
  %s4 = inlined_call_operand.hbm [shape: f32[8,256], index: 4, kind: output, shape index: {1}]
  %5 = xla_tuple %s3, %s4
  %s6 = sld [smem:[#allocation0]]
  $region65: #{tpu_custom_call.1} parent=0
    _
  %s8 = ssub.s32 1, %s6
  %s9 = scalar_select 0, %s8, %s6
  $region1: #{tpu_custom_call.1} parent=0
    #allocation2 [shape = 'u8[4096]{0}', space=vmem, size = 0x1000, scoped, tag = 'input window, operand 0, single buffered']
    #allocation3 [shape = 's32[2]{0}', space=sflag, size = 0x8, scoped, tag = 'scoped memory for tpu_custom_call.1']
    #allocation4 [shape = 's32[2]{0}', space=sflag, size = 0x8, scoped, tag = 'scoped memory for tpu_custom_call.1']
    #allocation5 [shape = 'u8[131072]{0}', space=vmem, size = 0x20000, scoped, tag = 'input window, operand 1']
    #allocation6 [shape = 's32[2]{0}', space=sflag, size = 0x8, scoped, tag = 'scoped memory for tpu_custom_call.1']
    #allocation7 [shape = 'u8[131072]{0}', space=vmem, size = 0x20000, scoped, tag = 'input window, operand 2']
    #allocation8 [shape = 'u8[8192]{0}', space=vmem, size = 0x2000, scoped, tag = 'output window, operand 0']
    #allocation9 [shape = 'u8[8192]{0}', space=vmem, size = 0x2000, scoped, tag = 'output window, operand 1']
    #allocation10 [shape = 's32[2]{0}', space=sflag, size = 0x8, scoped, tag = 'scoped memory for tpu_custom_call.1']
    %10 = vsyncpa [#allocation3], 0
    %11 = vsyncpa [#allocation6], 0
    %s12 = scalar_lea.sflag [#allocation6], 1
    %13 = vsyncpa %s12, 0
    %14 = vsyncpa [#allocation4], 0
    %s15 = scalar_lea.sflag [#allocation4], 1
    %16 = vsyncpa %s15, 0
    %17 = vsyncpa [#allocation10], 0
    %s18 = scalar_lea.sflag [#allocation10], 1
    %19 = vsyncpa %s18, 0
    loop: start=0, step=1, limit=4
    $region2: #{tpu_custom_call.1} parent=1 // loop_pre_header
      _
    $region3: #{tpu_custom_call.1} parent=1 // loop_header
      %s21 = sphi 0, %s25
      %p22 = scmp.ge.s32.totalorder %s21, 4
      %s29 = sphi 0, %s29
      %s31 = sphi 0, %s29
      %s32 = sphi 0, %s31
      %s46 = sphi 0, %s32
      %s52 = sphi 0, %s54
      %s55 = sphi 0, %s52
      %s56 = sphi 0, %s55
      %s72 = sphi 0, %s56
      %s78 = sphi 0, %s80
      %s81 = sphi 0, %s78
      %s82 = sphi 0, %s81
      %s98 = sphi 0, %s82
      %s104 = sphi 0, %s106
      %s107 = sphi 0, %s104
      %s108 = sphi 0, %s107
      %s124 = sphi 0, %s108
      %s130 = sphi 0, %s132
      %s133 = sphi 0, %s130
      %s134 = sphi 0, %s133
      %s150 = sphi 0, %s134
    $region4: #{tpu_custom_call.1} parent=1 // loop_header_branch
      %24 = sbr.rel (%p22) target = $region8
    $region5: #{tpu_custom_call.1} parent=1 // loop_body
      %s26 = ssub.s32 %s21, 1
      %s27 = ssub.s32 %s21, 2
      %s28 = sadd.s32 %s21, 1
      %s30 = sadd.s32 %s29, 1
      %p33 = scmp.eq.s32.totalorder %s21, 1
      %p34 = scmp.ne.s32.totalorder %s29, %s31
      %p35 = scmp.eq.s32.totalorder %s21, 0
      %p36 = por %p34, %p35
      %p37 = scmp.ne.s32.totalorder %s29, %s31
      %p38 = scmp.eq.s32.totalorder %s26, 1
      %p39 = por %p37, %p38
      %p40 = scmp.ne.s32.totalorder %s31, %s32
      %p41 = scmp.eq.s32.totalorder %s26, 0
      %p42 = por %p40, %p41
      %p43 = scmp.ne.s32.totalorder %s31, %s32
      %p44 = scmp.eq.s32.totalorder %s27, 1
      %p45 = por %p43, %p44
      %p47 = scmp.ne.s32.totalorder %s32, %s46
      %p48 = scmp.eq.s32.totalorder %s27, 0
      %p49 = por %p47, %p48
      %s50 = ssub.s32 %s21, %s28
      %p51 = scmp.eq.s32.totalorder %s50, 0
      %s53 = sadd.s32 %s52, 1
      %s54 = scalar_select %p51, %s52, %s53
      %p57 = pneg %p51
      %p58 = scmp.eq.s32.totalorder %s21, 1
      %p59 = por %p57, %p58
      %p60 = scmp.ne.s32.totalorder %s52, %s55
      %p61 = scmp.eq.s32.totalorder %s21, 0
      %p62 = por %p60, %p61
      %p63 = scmp.ne.s32.totalorder %s52, %s55
      %p64 = scmp.eq.s32.totalorder %s26, 1
      %p65 = por %p63, %p64
      %p66 = scmp.ne.s32.totalorder %s55, %s56
      %p67 = scmp.eq.s32.totalorder %s26, 0
      %p68 = por %p66, %p67
      %p69 = scmp.ne.s32.totalorder %s55, %s56
      %p70 = scmp.eq.s32.totalorder %s27, 1
      %p71 = por %p69, %p70
      %p73 = scmp.ne.s32.totalorder %s56, %s72
      %p74 = scmp.eq.s32.totalorder %s27, 0
      %p75 = por %p73, %p74
      %s76 = ssub.s32 %s21, %s28
      %p77 = scmp.eq.s32.totalorder %s76, 0
      %s79 = sadd.s32 %s78, 1
      %s80 = scalar_select %p77, %s78, %s79
      %p83 = pneg %p77
      %p84 = scmp.eq.s32.totalorder %s21, 1
      %p85 = por %p83, %p84
      %p86 = scmp.ne.s32.totalorder %s78, %s81
      %p87 = scmp.eq.s32.totalorder %s21, 0
      %p88 = por %p86, %p87
      %p89 = scmp.ne.s32.totalorder %s78, %s81
      %p90 = scmp.eq.s32.totalorder %s26, 1
      %p91 = por %p89, %p90
      %p92 = scmp.ne.s32.totalorder %s81, %s82
      %p93 = scmp.eq.s32.totalorder %s26, 0
      %p94 = por %p92, %p93
      %p95 = scmp.ne.s32.totalorder %s81, %s82
      %p96 = scmp.eq.s32.totalorder %s27, 1
      %p97 = por %p95, %p96
      %p99 = scmp.ne.s32.totalorder %s82, %s98
      %p100 = scmp.eq.s32.totalorder %s27, 0
      %p101 = por %p99, %p100
      %s102 = ssub.s32 %s21, %s28
      %p103 = scmp.eq.s32.totalorder %s102, 0
      %s105 = sadd.s32 %s104, 1
      %s106 = scalar_select %p103, %s104, %s105
      %p109 = pneg %p103
      %p110 = scmp.eq.s32.totalorder %s21, 1
      %p111 = por %p109, %p110
      %p112 = scmp.ne.s32.totalorder %s104, %s107
      %p113 = scmp.eq.s32.totalorder %s21, 0
      %p114 = por %p112, %p113
      %p115 = scmp.ne.s32.totalorder %s104, %s107
      %p116 = scmp.eq.s32.totalorder %s26, 1
      %p117 = por %p115, %p116
      %p118 = scmp.ne.s32.totalorder %s107, %s108
      %p119 = scmp.eq.s32.totalorder %s26, 0
      %p120 = por %p118, %p119
      %p121 = scmp.ne.s32.totalorder %s107, %s108
      %p122 = scmp.eq.s32.totalorder %s27, 1
      %p123 = por %p121, %p122
      %p125 = scmp.ne.s32.totalorder %s108, %s124
      %p126 = scmp.eq.s32.totalorder %s27, 0
      %p127 = por %p125, %p126
      %s128 = ssub.s32 %s21, %s28
      %p129 = scmp.eq.s32.totalorder %s128, 0
      %s131 = sadd.s32 %s130, 1
      %s132 = scalar_select %p129, %s130, %s131
      %p135 = pneg %p129
      %p136 = scmp.eq.s32.totalorder %s21, 1
      %p137 = por %p135, %p136
      %p138 = scmp.ne.s32.totalorder %s130, %s133
      %p139 = scmp.eq.s32.totalorder %s21, 0
      %p140 = por %p138, %p139
      %p141 = scmp.ne.s32.totalorder %s130, %s133
      %p142 = scmp.eq.s32.totalorder %s26, 1
      %p143 = por %p141, %p142
      %p144 = scmp.ne.s32.totalorder %s133, %s134
      %p145 = scmp.eq.s32.totalorder %s26, 0
      %p146 = por %p144, %p145
      %p147 = scmp.ne.s32.totalorder %s133, %s134
      %p148 = scmp.eq.s32.totalorder %s27, 1
      %p149 = por %p147, %p148
      %p151 = scmp.ne.s32.totalorder %s134, %s150
      %p152 = scmp.eq.s32.totalorder %s27, 0
      %p153 = por %p151, %p152
      %p154 = scmp.le.s32.totalorder 1, %s21
      %p155 = scmp.lt.s32.totalorder %s21, 3
      %p156 = pnand %p154, %p155
      %p157 = pneg %p156
      // Predicated region
      $region9: #{tpu_custom_call.1} parent=5 // pred_check
        _
      $region10: #{tpu_custom_call.1} parent=5 // pred_check_branch
        %159 = sbr.rel (%p156) target = $region12
      $region11: #{tpu_custom_call.1} parent=5 // pred_region
        %s160 = ssub.s32 %s21, 1
        // Predicated region
        $region13: #{tpu_custom_call.1} parent=11 // pred_check
          %p161 = pneg %p42
        $region14: #{tpu_custom_call.1} parent=11 // pred_check_branch
          %163 = sbr.rel (%p161) target = $region16
        $region15: #{tpu_custom_call.1} parent=11 // pred_region
          %s165 = ssub.s32 128, 128
          %166 = vsyncadd [#allocation3], %s165
          %s168 = sshll.u32 [#allocation2], 4
          %s169 = int_to_ptr.vmem [resolvable:$true] %s168
          %171 = dma.hbm_to_vmem [thread:$0]  %s0, 128, %s169, [#allocation3]
        $region16: #{tpu_custom_call.1} parent=11 // pred_fallthru
          _
      $region12: #{tpu_custom_call.1} parent=5 // pred_fallthru
        _
      %p172 = scmp.lt.s32.totalorder %s21, 2
      // Predicated region
      $region17: #{tpu_custom_call.1} parent=5 // pred_check
        %p173 = pneg %p172
      $region18: #{tpu_custom_call.1} parent=5 // pred_check_branch
        %175 = sbr.rel (%p173) target = $region20
      $region19: #{tpu_custom_call.1} parent=5 // pred_region
        // Predicated region
        $region21: #{tpu_custom_call.1} parent=19 // pred_check
          %p176 = pneg %p62
        $region22: #{tpu_custom_call.1} parent=19 // pred_check_branch
          %178 = sbr.rel (%p176) target = $region24
        $region23: #{tpu_custom_call.1} parent=19 // pred_region
          %s179 = sand.u32 %s21, 1
          %s180 = scalar_lea.sflag [#allocation6], %s179
          %s181 = sand.u32 %s52, 1
          %s182 = smul.addr %s181, 128
          %s183 = scalar_lea.vmem [#allocation5], %s182
          %s184 = smul.u32 16, %s21
          %s186 = ssub.s32 2048, 2048
          %187 = vsyncadd %s180, %s186
          %s188 = smul.addr %s184, 128
          %s189 = scalar_lea.hbm %s1, %s188
          %s190 = sshll.u32 %s183, 4
          %s191 = int_to_ptr.vmem [resolvable:$true] %s190
          %196 = dma.hbm_to_vmem [thread:$0]  %s189, 2048, %s191, %s180, 128, 128, 8
        $region24: #{tpu_custom_call.1} parent=19 // pred_fallthru
          _
        // Predicated region
        $region25: #{tpu_custom_call.1} parent=19 // pred_check
          %p197 = pneg %p88
        $region26: #{tpu_custom_call.1} parent=19 // pred_check_branch
          %199 = sbr.rel (%p197) target = $region28
        $region27: #{tpu_custom_call.1} parent=19 // pred_region
          %s200 = sand.u32 %s21, 1
          %s201 = scalar_lea.sflag [#allocation6], %s200
          %s202 = sand.u32 %s78, 1
          %s203 = smul.addr %s202, 128
          %s204 = scalar_lea.vmem [#allocation7], %s203
          %s205 = smul.u32 16, %s21
          %s207 = ssub.s32 2048, 2048
          %208 = vsyncadd %s201, %s207
          %s209 = smul.addr %s205, 128
          %s210 = scalar_lea.hbm %s2, %s209
          %s211 = sshll.u32 %s204, 4
          %s212 = int_to_ptr.vmem [resolvable:$true] %s211
          %217 = dma.hbm_to_vmem [thread:$0]  %s210, 2048, %s212, %s201, 128, 128, 8
        $region28: #{tpu_custom_call.1} parent=19 // pred_fallthru
          _
      $region20: #{tpu_custom_call.1} parent=5 // pred_fallthru
        _
      %p218 = scmp.le.s32.totalorder 1, %s21
      %p219 = scmp.lt.s32.totalorder %s21, 3
      %p220 = pnand %p218, %p219
      %p221 = pneg %p220
      // Predicated region
      $region29: #{tpu_custom_call.1} parent=5 // pred_check
        _
      $region30: #{tpu_custom_call.1} parent=5 // pred_check_branch
        %223 = sbr.rel (%p220) target = $region32
      $region31: #{tpu_custom_call.1} parent=5 // pred_region
        %s224 = ssub.s32 %s21, 1
        // Predicated region
        $region33: #{tpu_custom_call.1} parent=31 // pred_check
          %p225 = pneg %p42
        $region34: #{tpu_custom_call.1} parent=31 // pred_check_branch
          %227 = sbr.rel (%p225) target = $region36
        $region35: #{tpu_custom_call.1} parent=31 // pred_region
          %228 = dma.done [#allocation3], 128
        $region36: #{tpu_custom_call.1} parent=31 // pred_fallthru
          _
        %s229 = sand.u32 %s26, 1
        %s230 = scalar_lea.sflag [#allocation6], %s229
        %s231 = sand.u32 %s55, 1
        %s232 = smul.addr %s231, 128
        %s233 = scalar_lea.vmem [#allocation5], %s232
        // Predicated region
        $region37: #{tpu_custom_call.1} parent=31 // pred_check
          %p234 = pneg %p68
        $region38: #{tpu_custom_call.1} parent=31 // pred_check_branch
          %236 = sbr.rel (%p234) target = $region40
        $region39: #{tpu_custom_call.1} parent=31 // pred_region
          %237 = dma.done %s230, 2048
        $region40: #{tpu_custom_call.1} parent=31 // pred_fallthru
          _
        %s238 = sand.u32 %s26, 1
        %s239 = scalar_lea.sflag [#allocation6], %s238
        %s240 = sand.u32 %s81, 1
        %s241 = smul.addr %s240, 128
        %s242 = scalar_lea.vmem [#allocation7], %s241
        // Predicated region
        $region41: #{tpu_custom_call.1} parent=31 // pred_check
          %p243 = pneg %p94
        $region42: #{tpu_custom_call.1} parent=31 // pred_check_branch
          %245 = sbr.rel (%p243) target = $region44
        $region43: #{tpu_custom_call.1} parent=31 // pred_region
          %246 = dma.done %s239, 2048
        $region44: #{tpu_custom_call.1} parent=31 // pred_fallthru
          _
        %p247 = pneg %p42
        %p248 = pneg %p39
        %s249 = sand.u32 %s26, 1
        %s250 = scalar_lea.sflag [#allocation6], %s249
        %s251 = sand.u32 %s55, 1
        %s252 = smul.addr %s251, 128
        %s253 = scalar_lea.vmem [#allocation5], %s252
        %p254 = pneg %p68
        %p255 = pneg %p65
        %s256 = sand.u32 %s26, 1
        %s257 = scalar_lea.sflag [#allocation6], %s256
        %s258 = sand.u32 %s81, 1
        %s259 = smul.addr %s258, 128
        %s260 = scalar_lea.vmem [#allocation7], %s259
        %p261 = pneg %p94
        %p262 = pneg %p91
        %p263 = pneg %p120
        %p264 = pneg %p117
        %s265 = sand.u32 %s107, 1
        %s266 = scalar_lea.sflag [#allocation4], %s265
        %s267 = sand.u32 %s107, 1
        %s268 = smul.addr %s267, 8
        %s269 = scalar_lea.vmem [#allocation8], %s268
        %p270 = pneg %p146
        %p271 = pneg %p143
        %s272 = sand.u32 %s133, 1
        %s273 = scalar_lea.sflag [#allocation10], %s272
        %s274 = sand.u32 %s133, 1
        %s275 = smul.addr %s274, 8
        %s276 = scalar_lea.vmem [#allocation9], %s275
        %s277 = smul.u32 16, %s26
        %s278 = smul.u32 16, %s26
        %v279 = vld [vmem:[#allocation2] sm:$0xff]
        %v280 = vld [vmem:[%s233] sm:$0xff]
        %v281 = vld [vmem:[%s233 + $0x8] sm:$0xff]
        %v282 = vld [vmem:[%s233 + $0x10] sm:$0xff]
        %v283 = vld [vmem:[%s233 + $0x18] sm:$0xff]
        %v284 = vld [vmem:[%s233 + $0x20] sm:$0xff]
        %v285 = vld [vmem:[%s233 + $0x28] sm:$0xff]
        %v286 = vld [vmem:[%s233 + $0x30] sm:$0xff]
        %v287 = vld [vmem:[%s233 + $0x38] sm:$0xff]
        %v288 = vld [vmem:[%s233 + $0x40] sm:$0xff]
        %v289 = vld [vmem:[%s233 + $0x48] sm:$0xff]
        %v290 = vld [vmem:[%s233 + $0x50] sm:$0xff]
        %v291 = vld [vmem:[%s233 + $0x58] sm:$0xff]
        %v292 = vld [vmem:[%s233 + $0x60] sm:$0xff]
        %v293 = vld [vmem:[%s233 + $0x68] sm:$0xff]
        %v294 = vld [vmem:[%s233 + $0x70] sm:$0xff]
        %v295 = vld [vmem:[%s233 + $0x78] sm:$0xff]
        %v296 = vld [vmem:[%s242] sm:$0xff]
        %v297 = vld [vmem:[%s242 + $0x8] sm:$0xff]
        %v298 = vld [vmem:[%s242 + $0x10] sm:$0xff]
        %v299 = vld [vmem:[%s242 + $0x18] sm:$0xff]
        %v300 = vld [vmem:[%s242 + $0x20] sm:$0xff]
        %v301 = vld [vmem:[%s242 + $0x28] sm:$0xff]
        %v302 = vld [vmem:[%s242 + $0x30] sm:$0xff]
        %v303 = vld [vmem:[%s242 + $0x38] sm:$0xff]
        %v304 = vld [vmem:[%s242 + $0x40] sm:$0xff]
        %v305 = vld [vmem:[%s242 + $0x48] sm:$0xff]
        %v306 = vld [vmem:[%s242 + $0x50] sm:$0xff]
        %v307 = vld [vmem:[%s242 + $0x58] sm:$0xff]
        %v308 = vld [vmem:[%s242 + $0x60] sm:$0xff]
        %v309 = vld [vmem:[%s242 + $0x68] sm:$0xff]
        %v310 = vld [vmem:[%s242 + $0x70] sm:$0xff]
        %v311 = vld [vmem:[%s242 + $0x78] sm:$0xff]
        %vm312 = vcmp.gt.f32.partialorder %v296, 0.0
        %vm313 = vcmp.gt.f32.partialorder %v297, 0.0
        %vm314 = vcmp.gt.f32.partialorder %v298, 0.0
        %vm315 = vcmp.gt.f32.partialorder %v299, 0.0
        %vm316 = vcmp.gt.f32.partialorder %v300, 0.0
        %vm317 = vcmp.gt.f32.partialorder %v301, 0.0
        %vm318 = vcmp.gt.f32.partialorder %v302, 0.0
        %vm319 = vcmp.gt.f32.partialorder %v303, 0.0
        %vm320 = vcmp.gt.f32.partialorder %v304, 0.0
        %vm321 = vcmp.gt.f32.partialorder %v305, 0.0
        %vm322 = vcmp.gt.f32.partialorder %v306, 0.0
        %vm323 = vcmp.gt.f32.partialorder %v307, 0.0
        %vm324 = vcmp.gt.f32.partialorder %v308, 0.0
        %vm325 = vcmp.gt.f32.partialorder %v309, 0.0
        %vm326 = vcmp.gt.f32.partialorder %v310, 0.0
        %vm327 = vcmp.gt.f32.partialorder %v311, 0.0
        %v328 = vsel %vm312, 1, 0
        %v329 = vsel %vm313, 1, 0
        %v330 = vsel %vm314, 1, 0
        %v331 = vsel %vm315, 1, 0
        %v332 = vsel %vm316, 1, 0
        %v333 = vsel %vm317, 1, 0
        %v334 = vsel %vm318, 1, 0
        %v335 = vsel %vm319, 1, 0
        %v336 = vsel %vm320, 1, 0
        %v337 = vsel %vm321, 1, 0
        %v338 = vsel %vm322, 1, 0
        %v339 = vsel %vm323, 1, 0
        %v340 = vsel %vm324, 1, 0
        %v341 = vsel %vm325, 1, 0
        %v342 = vsel %vm326, 1, 0
        %v343 = vsel %vm327, 1, 0
        %v344 = vcvt.s32.f32 %v328
        %v345 = vcvt.s32.f32 %v329
        %v346 = vcvt.s32.f32 %v330
        %v347 = vcvt.s32.f32 %v331
        %v348 = vcvt.s32.f32 %v332
        %v349 = vcvt.s32.f32 %v333
        %v350 = vcvt.s32.f32 %v334
        %v351 = vcvt.s32.f32 %v335
        %v352 = vcvt.s32.f32 %v336
        %v353 = vcvt.s32.f32 %v337
        %v354 = vcvt.s32.f32 %v338
        %v355 = vcvt.s32.f32 %v339
        %v356 = vcvt.s32.f32 %v340
        %v357 = vcvt.s32.f32 %v341
        %v358 = vcvt.s32.f32 %v342
        %v359 = vcvt.s32.f32 %v343
        %v360 = vsel %vm312, %v280, 0.0
        %v361 = vsel %vm313, %v281, 0.0
        %v362 = vsel %vm314, %v282, 0.0
        %v363 = vsel %vm315, %v283, 0.0
        %v364 = vsel %vm316, %v284, 0.0
        %v365 = vsel %vm317, %v285, 0.0
        %v366 = vsel %vm318, %v286, 0.0
        %v367 = vsel %vm319, %v287, 0.0
        %v368 = vsel %vm320, %v288, 0.0
        %v369 = vsel %vm321, %v289, 0.0
        %v370 = vsel %vm322, %v290, 0.0
        %v371 = vsel %vm323, %v291, 0.0
        %v372 = vsel %vm324, %v292, 0.0
        %v373 = vsel %vm325, %v293, 0.0
        %v374 = vsel %vm326, %v294, 0.0
        %v375 = vsel %vm327, %v295, 0.0
        %376 = vmatprep.subr.mxu0 0.0
        %v377 = vand.u32 %v360, 4294901760
        %378 = vmatpush1.xpose.msra.mxu0 %v377
        %379 = vmatprep.subr.mxu0 0.0
        %v380 = vand.u32 %v361, 4294901760
        %381 = vmatpush1.xpose.msra.mxu0 %v380
        %382 = vmatprep.subr.mxu0 0.0
        %v383 = vand.u32 %v362, 4294901760
        %384 = vmatpush1.xpose.msra.mxu0 %v383
        %385 = vmatprep.subr.mxu0 0.0
        %v386 = vand.u32 %v363, 4294901760
        %387 = vmatpush1.xpose.msra.mxu0 %v386
        %388 = vmatprep.subr.mxu0 0.0
        %v389 = vand.u32 %v364, 4294901760
        %390 = vmatpush1.xpose.msra.mxu0 %v389
        %391 = vmatprep.subr.mxu0 0.0
        %v392 = vand.u32 %v365, 4294901760
        %393 = vmatpush1.xpose.msra.mxu0 %v392
        %394 = vmatprep.subr.mxu0 0.0
        %v395 = vand.u32 %v366, 4294901760
        %396 = vmatpush1.xpose.msra.mxu0 %v395
        %397 = vmatprep.subr.mxu0 0.0
        %v398 = vand.u32 %v367, 4294901760
        %399 = vmatpush1.xpose.msra.mxu0 %v398
        %400 = vmatprep.subr.mxu0 0.0
        %v401 = vand.u32 %v368, 4294901760
        %402 = vmatpush1.xpose.msra.mxu0 %v401
        %403 = vmatprep.subr.mxu0 0.0
        %v404 = vand.u32 %v369, 4294901760
        %405 = vmatpush1.xpose.msra.mxu0 %v404
        %406 = vmatprep.subr.mxu0 0.0
        %v407 = vand.u32 %v370, 4294901760
        %408 = vmatpush1.xpose.msra.mxu0 %v407
        %409 = vmatprep.subr.mxu0 0.0
        %v410 = vand.u32 %v371, 4294901760
        %411 = vmatpush1.xpose.msra.mxu0 %v410
        %412 = vmatprep.subr.mxu0 0.0
        %v413 = vand.u32 %v372, 4294901760
        %414 = vmatpush1.xpose.msra.mxu0 %v413
        %415 = vmatprep.subr.mxu0 0.0
        %v416 = vand.u32 %v373, 4294901760
        %417 = vmatpush1.xpose.msra.mxu0 %v416
        %418 = vmatprep.subr.mxu0 0.0
        %v419 = vand.u32 %v374, 4294901760
        %420 = vmatpush1.xpose.msra.mxu0 %v419
        %421 = vmatprep.subr.mxu0 0.0
        %v422 = vand.u32 %v375, 4294901760
        %423 = vmatpush1.xpose.msra.mxu0 %v422
        %424 = vmatprep.subr.mxu0 0.0
        %425 = vmatpush1.xpose.msra.mxu0 0.0
        %426 = vmatprep.subr.mxu0 0.0
        %427 = vmatpush1.xpose.msra.mxu0 0.0
        %428 = vmatprep.subr.mxu0 0.0
        %429 = vmatpush1.xpose.msra.mxu0 0.0
        %430 = vmatprep.subr.mxu0 0.0
        %431 = vmatpush1.xpose.msra.mxu0 0.0
        %432 = vmatprep.subr.mxu0 0.0
        %433 = vmatpush1.xpose.msra.mxu0 0.0
        %434 = vmatprep.subr.mxu0 0.0
        %435 = vmatpush1.xpose.msra.mxu0 0.0
        %436 = vmatprep.subr.mxu0 0.0
        %437 = vmatpush1.xpose.msra.mxu0 0.0
        %438 = vmatprep.subr.mxu0 0.0
        %439 = vmatpush1.xpose.msra.mxu0 0.0
        %440 = vmatprep.subr.mxu0 0.0
        %441 = vmatpush1.xpose.msra.mxu0 0.0
        %442 = vmatprep.subr.mxu0 0.0
        %443 = vmatpush1.xpose.msra.mxu0 0.0
        %444 = vmatprep.subr.mxu0 0.0
        %445 = vmatpush1.xpose.msra.mxu0 0.0
        %446 = vmatprep.subr.mxu0 0.0
        %447 = vmatpush1.xpose.msra.mxu0 0.0
        %448 = vmatprep.subr.mxu0 0.0
        %449 = vmatpush1.xpose.msra.mxu0 0.0
        %450 = vmatprep.subr.mxu0 0.0
        %451 = vmatpush1.xpose.msra.mxu0 0.0
        %452 = vmatprep.subr.mxu0 0.0
        %453 = vmatpush1.xpose.msra.mxu0 0.0
        %454 = vmatprep.subr.mxu0 0.0
        %455 = vmatpush1.xpose.msra.mxu0 0.0
        %456 = vmatprep.mubr.f32.mxu0 0.0
        %v457 = vand.u32 %v279, 4294901760
        %v458 = vsub.f32 %v279, %v457
        %v459 = vand.u32 %v458, 4294901760
        %v460 = vsub.f32 %v458, %v459
        %v461 = vand.u32 %v460, 4294901760
        %462 = vmatmul.mubr.f32.gmra.mrb[0].mxu0 %v461
        %v463 = vpop.f32.mrb[0].mxu0
        %v464 = vadd.f32 0.0, %v463
        %v465 = vpop.f32.mrb[0].mxu0
        %466 = vdwg.mxu0
        %467 = vmatprep.subr.mxu0 0.0
        %v468 = vand.u32 %v360, 4294901760
        %v469 = vsub.f32 %v360, %v468
        %v470 = vand.u32 %v469, 4294901760
        %v471 = vsub.f32 %v469, %v470
        %v472 = vand.u32 %v471, 4294901760
        %473 = vmatpush1.xpose.msra.mxu0 %v472
        %474 = vmatprep.subr.mxu0 0.0
        %v475 = vand.u32 %v361, 4294901760
        %v476 = vsub.f32 %v361, %v475
        %v477 = vand.u32 %v476, 4294901760
        %v478 = vsub.f32 %v476, %v477
        %v479 = vand.u32 %v478, 4294901760
        %480 = vmatpush1.xpose.msra.mxu0 %v479
        %481 = vmatprep.subr.mxu0 0.0
        %v482 = vand.u32 %v362, 4294901760
        %v483 = vsub.f32 %v362, %v482
        %v484 = vand.u32 %v483, 4294901760
        %v485 = vsub.f32 %v483, %v484
        %v486 = vand.u32 %v485, 4294901760
        %487 = vmatpush1.xpose.msra.mxu0 %v486
        %488 = vmatprep.subr.mxu0 0.0
        %v489 = vand.u32 %v363, 4294901760
        %v490 = vsub.f32 %v363, %v489
        %v491 = vand.u32 %v490, 4294901760
        %v492 = vsub.f32 %v490, %v491
        %v493 = vand.u32 %v492, 4294901760
        %494 = vmatpush1.xpose.msra.mxu0 %v493
        %495 = vmatprep.subr.mxu0 0.0
        %v496 = vand.u32 %v364, 4294901760
        %v497 = vsub.f32 %v364, %v496
        %v498 = vand.u32 %v497, 4294901760
        %v499 = vsub.f32 %v497, %v498
        %v500 = vand.u32 %v499, 4294901760
        %501 = vmatpush1.xpose.msra.mxu0 %v500
        %502 = vmatprep.subr.mxu0 0.0
        %v503 = vand.u32 %v365, 4294901760
        %v504 = vsub.f32 %v365, %v503
        %v505 = vand.u32 %v504, 4294901760
        %v506 = vsub.f32 %v504, %v505
        %v507 = vand.u32 %v506, 4294901760
        %508 = vmatpush1.xpose.msra.mxu0 %v507
        %509 = vmatprep.subr.mxu0 0.0
        %v510 = vand.u32 %v366, 4294901760
        %v511 = vsub.f32 %v366, %v510
        %v512 = vand.u32 %v511, 4294901760
        %v513 = vsub.f32 %v511, %v512
        %v514 = vand.u32 %v513, 4294901760
        %515 = vmatpush1.xpose.msra.mxu0 %v514
        %516 = vmatprep.subr.mxu0 0.0
        %v517 = vand.u32 %v367, 4294901760
        %v518 = vsub.f32 %v367, %v517
        %v519 = vand.u32 %v518, 4294901760
        %v520 = vsub.f32 %v518, %v519
        %v521 = vand.u32 %v520, 4294901760
        %522 = vmatpush1.xpose.msra.mxu0 %v521
        %523 = vmatprep.subr.mxu0 0.0
        %v524 = vand.u32 %v368, 4294901760
        %v525 = vsub.f32 %v368, %v524
        %v526 = vand.u32 %v525, 4294901760
        %v527 = vsub.f32 %v525, %v526
        %v528 = vand.u32 %v527, 4294901760
        %529 = vmatpush1.xpose.msra.mxu0 %v528
        %530 = vmatprep.subr.mxu0 0.0
        %v531 = vand.u32 %v369, 4294901760
        %v532 = vsub.f32 %v369, %v531
        %v533 = vand.u32 %v532, 4294901760
        %v534 = vsub.f32 %v532, %v533
        %v535 = vand.u32 %v534, 4294901760
        %536 = vmatpush1.xpose.msra.mxu0 %v535
        %537 = vmatprep.subr.mxu0 0.0
        %v538 = vand.u32 %v370, 4294901760
        %v539 = vsub.f32 %v370, %v538
        %v540 = vand.u32 %v539, 4294901760
        %v541 = vsub.f32 %v539, %v540
        %v542 = vand.u32 %v541, 4294901760
        %543 = vmatpush1.xpose.msra.mxu0 %v542
        %544 = vmatprep.subr.mxu0 0.0
        %v545 = vand.u32 %v371, 4294901760
        %v546 = vsub.f32 %v371, %v545
        %v547 = vand.u32 %v546, 4294901760
        %v548 = vsub.f32 %v546, %v547
        %v549 = vand.u32 %v548, 4294901760
        %550 = vmatpush1.xpose.msra.mxu0 %v549
        %551 = vmatprep.subr.mxu0 0.0
        %v552 = vand.u32 %v372, 4294901760
        %v553 = vsub.f32 %v372, %v552
        %v554 = vand.u32 %v553, 4294901760
        %v555 = vsub.f32 %v553, %v554
        %v556 = vand.u32 %v555, 4294901760
        %557 = vmatpush1.xpose.msra.mxu0 %v556
        %558 = vmatprep.subr.mxu0 0.0
        %v559 = vand.u32 %v373, 4294901760
        %v560 = vsub.f32 %v373, %v559
        %v561 = vand.u32 %v560, 4294901760
        %v562 = vsub.f32 %v560, %v561
        %v563 = vand.u32 %v562, 4294901760
        %564 = vmatpush1.xpose.msra.mxu0 %v563
        %565 = vmatprep.subr.mxu0 0.0
        %v566 = vand.u32 %v374, 4294901760
        %v567 = vsub.f32 %v374, %v566
        %v568 = vand.u32 %v567, 4294901760
        %v569 = vsub.f32 %v567, %v568
        %v570 = vand.u32 %v569, 4294901760
        %571 = vmatpush1.xpose.msra.mxu0 %v570
        %572 = vmatprep.subr.mxu0 0.0
        %v573 = vand.u32 %v375, 4294901760
        %v574 = vsub.f32 %v375, %v573
        %v575 = vand.u32 %v574, 4294901760
        %v576 = vsub.f32 %v574, %v575
        %v577 = vand.u32 %v576, 4294901760
        %578 = vmatpush1.xpose.msra.mxu0 %v577
        %579 = vmatprep.subr.mxu0 0.0
        %580 = vmatpush1.xpose.msra.mxu0 0.0
        %581 = vmatprep.subr.mxu0 0.0
        %582 = vmatpush1.xpose.msra.mxu0 0.0
        %583 = vmatprep.subr.mxu0 0.0
        %584 = vmatpush1.xpose.msra.mxu0 0.0
        %585 = vmatprep.subr.mxu0 0.0
        %586 = vmatpush1.xpose.msra.mxu0 0.0
        %587 = vmatprep.subr.mxu0 0.0
        %588 = vmatpush1.xpose.msra.mxu0 0.0
        %589 = vmatprep.subr.mxu0 0.0
        %590 = vmatpush1.xpose.msra.mxu0 0.0
        %591 = vmatprep.subr.mxu0 0.0
        %592 = vmatpush1.xpose.msra.mxu0 0.0
        %593 = vmatprep.subr.mxu0 0.0
        %594 = vmatpush1.xpose.msra.mxu0 0.0
        %595 = vmatprep.subr.mxu0 0.0
        %596 = vmatpush1.xpose.msra.mxu0 0.0
        %597 = vmatprep.subr.mxu0 0.0
        %598 = vmatpush1.xpose.msra.mxu0 0.0
        %599 = vmatprep.subr.mxu0 0.0
        %600 = vmatpush1.xpose.msra.mxu0 0.0
        %601 = vmatprep.subr.mxu0 0.0
        %602 = vmatpush1.xpose.msra.mxu0 0.0
        %603 = vmatprep.subr.mxu0 0.0
        %604 = vmatpush1.xpose.msra.mxu0 0.0
        %605 = vmatprep.subr.mxu0 0.0
        %606 = vmatpush1.xpose.msra.mxu0 0.0
        %607 = vmatprep.subr.mxu0 0.0
        %608 = vmatpush1.xpose.msra.mxu0 0.0
        %609 = vmatprep.subr.mxu0 0.0
        %610 = vmatpush1.xpose.msra.mxu0 0.0
        %611 = vmatprep.mubr.f32.mxu0 0.0
        %v612 = vand.u32 %v279, 4294901760
        %613 = vmatmul.mubr.f32.gmra.mrb[0].mxu0 %v612
        %v614 = vpop.f32.mrb[0].mxu0
        %v615 = vadd.f32 %v464, %v614
        %v616 = vpop.f32.mrb[0].mxu0
        %617 = vdwg.mxu0
        %618 = vmatprep.subr.mxu0 0.0
        %v619 = vand.u32 %v360, 4294901760
        %v620 = vsub.f32 %v360, %v619
        %621 = vmatpush1.xpose.msra.mxu0 %v620
        %622 = vmatprep.subr.mxu0 0.0
        %v623 = vand.u32 %v361, 4294901760
        %v624 = vsub.f32 %v361, %v623
        %625 = vmatpush1.xpose.msra.mxu0 %v624
        %626 = vmatprep.subr.mxu0 0.0
        %v627 = vand.u32 %v362, 4294901760
        %v628 = vsub.f32 %v362, %v627
        %629 = vmatpush1.xpose.msra.mxu0 %v628
        %630 = vmatprep.subr.mxu0 0.0
        %v631 = vand.u32 %v363, 4294901760
        %v632 = vsub.f32 %v363, %v631
        %633 = vmatpush1.xpose.msra.mxu0 %v632
        %634 = vmatprep.subr.mxu0 0.0
        %v635 = vand.u32 %v364, 4294901760
        %v636 = vsub.f32 %v364, %v635
        %637 = vmatpush1.xpose.msra.mxu0 %v636
        %638 = vmatprep.subr.mxu0 0.0
        %v639 = vand.u32 %v365, 4294901760
        %v640 = vsub.f32 %v365, %v639
        %641 = vmatpush1.xpose.msra.mxu0 %v640
        %642 = vmatprep.subr.mxu0 0.0
        %v643 = vand.u32 %v366, 4294901760
        %v644 = vsub.f32 %v366, %v643
        %645 = vmatpush1.xpose.msra.mxu0 %v644
        %646 = vmatprep.subr.mxu0 0.0
        %v647 = vand.u32 %v367, 4294901760
        %v648 = vsub.f32 %v367, %v647
        %649 = vmatpush1.xpose.msra.mxu0 %v648
        %650 = vmatprep.subr.mxu0 0.0
        %v651 = vand.u32 %v368, 4294901760
        %v652 = vsub.f32 %v368, %v651
        %653 = vmatpush1.xpose.msra.mxu0 %v652
        %654 = vmatprep.subr.mxu0 0.0
        %v655 = vand.u32 %v369, 4294901760
        %v656 = vsub.f32 %v369, %v655
        %657 = vmatpush1.xpose.msra.mxu0 %v656
        %658 = vmatprep.subr.mxu0 0.0
        %v659 = vand.u32 %v370, 4294901760
        %v660 = vsub.f32 %v370, %v659
        %661 = vmatpush1.xpose.msra.mxu0 %v660
        %662 = vmatprep.subr.mxu0 0.0
        %v663 = vand.u32 %v371, 4294901760
        %v664 = vsub.f32 %v371, %v663
        %665 = vmatpush1.xpose.msra.mxu0 %v664
        %666 = vmatprep.subr.mxu0 0.0
        %v667 = vand.u32 %v372, 4294901760
        %v668 = vsub.f32 %v372, %v667
        %669 = vmatpush1.xpose.msra.mxu0 %v668
        %670 = vmatprep.subr.mxu0 0.0
        %v671 = vand.u32 %v373, 4294901760
        %v672 = vsub.f32 %v373, %v671
        %673 = vmatpush1.xpose.msra.mxu0 %v672
        %674 = vmatprep.subr.mxu0 0.0
        %v675 = vand.u32 %v374, 4294901760
        %v676 = vsub.f32 %v374, %v675
        %677 = vmatpush1.xpose.msra.mxu0 %v676
        %678 = vmatprep.subr.mxu0 0.0
        %v679 = vand.u32 %v375, 4294901760
        %v680 = vsub.f32 %v375, %v679
        %681 = vmatpush1.xpose.msra.mxu0 %v680
        %682 = vmatprep.subr.mxu0 0.0
        %683 = vmatpush1.xpose.msra.mxu0 0.0
        %684 = vmatprep.subr.mxu0 0.0
        %685 = vmatpush1.xpose.msra.mxu0 0.0
        %686 = vmatprep.subr.mxu0 0.0
        %687 = vmatpush1.xpose.msra.mxu0 0.0
        %688 = vmatprep.subr.mxu0 0.0
        %689 = vmatpush1.xpose.msra.mxu0 0.0
        %690 = vmatprep.subr.mxu0 0.0
        %691 = vmatpush1.xpose.msra.mxu0 0.0
        %692 = vmatprep.subr.mxu0 0.0
        %693 = vmatpush1.xpose.msra.mxu0 0.0
        %694 = vmatprep.subr.mxu0 0.0
        %695 = vmatpush1.xpose.msra.mxu0 0.0
        %696 = vmatprep.subr.mxu0 0.0
        %697 = vmatpush1.xpose.msra.mxu0 0.0
        %698 = vmatprep.subr.mxu0 0.0
        %699 = vmatpush1.xpose.msra.mxu0 0.0
        %700 = vmatprep.subr.mxu0 0.0
        %701 = vmatpush1.xpose.msra.mxu0 0.0
        %702 = vmatprep.subr.mxu0 0.0
        %703 = vmatpush1.xpose.msra.mxu0 0.0
        %704 = vmatprep.subr.mxu0 0.0
        %705 = vmatpush1.xpose.msra.mxu0 0.0
        %706 = vmatprep.subr.mxu0 0.0
        %707 = vmatpush1.xpose.msra.mxu0 0.0
        %708 = vmatprep.subr.mxu0 0.0
        %709 = vmatpush1.xpose.msra.mxu0 0.0
        %710 = vmatprep.subr.mxu0 0.0
        %711 = vmatpush1.xpose.msra.mxu0 0.0
        %712 = vmatprep.subr.mxu0 0.0
        %713 = vmatpush1.xpose.msra.mxu0 0.0
        %714 = vmatprep.mubr.f32.mxu0 0.0
        %v715 = vand.u32 %v279, 4294901760
        %v716 = vsub.f32 %v279, %v715
        %717 = vmatmul.mubr.f32.gmra.mrb[0].mxu0 %v716
        %v718 = vpop.f32.mrb[0].mxu0
        %v719 = vadd.f32 %v615, %v718
        %v720 = vpop.f32.mrb[0].mxu0
        %721 = vdwg.mxu0
        %722 = vmatprep.subr.mxu0 0.0
        %v723 = vand.u32 %v360, 4294901760
        %724 = vmatpush1.xpose.msra.mxu0 %v723
        %725 = vmatprep.subr.mxu0 0.0
        %v726 = vand.u32 %v361, 4294901760
        %727 = vmatpush1.xpose.msra.mxu0 %v726
        %728 = vmatprep.subr.mxu0 0.0
        %v729 = vand.u32 %v362, 4294901760
        %730 = vmatpush1.xpose.msra.mxu0 %v729
        %731 = vmatprep.subr.mxu0 0.0
        %v732 = vand.u32 %v363, 4294901760
        %733 = vmatpush1.xpose.msra.mxu0 %v732
        %734 = vmatprep.subr.mxu0 0.0
        %v735 = vand.u32 %v364, 4294901760
        %736 = vmatpush1.xpose.msra.mxu0 %v735
        %737 = vmatprep.subr.mxu0 0.0
        %v738 = vand.u32 %v365, 4294901760
        %739 = vmatpush1.xpose.msra.mxu0 %v738
        %740 = vmatprep.subr.mxu0 0.0
        %v741 = vand.u32 %v366, 4294901760
        %742 = vmatpush1.xpose.msra.mxu0 %v741
        %743 = vmatprep.subr.mxu0 0.0
        %v744 = vand.u32 %v367, 4294901760
        %745 = vmatpush1.xpose.msra.mxu0 %v744
        %746 = vmatprep.subr.mxu0 0.0
        %v747 = vand.u32 %v368, 4294901760
        %748 = vmatpush1.xpose.msra.mxu0 %v747
        %749 = vmatprep.subr.mxu0 0.0
        %v750 = vand.u32 %v369, 4294901760
        %751 = vmatpush1.xpose.msra.mxu0 %v750
        %752 = vmatprep.subr.mxu0 0.0
        %v753 = vand.u32 %v370, 4294901760
        %754 = vmatpush1.xpose.msra.mxu0 %v753
        %755 = vmatprep.subr.mxu0 0.0
        %v756 = vand.u32 %v371, 4294901760
        %757 = vmatpush1.xpose.msra.mxu0 %v756
        %758 = vmatprep.subr.mxu0 0.0
        %v759 = vand.u32 %v372, 4294901760
        %760 = vmatpush1.xpose.msra.mxu0 %v759
        %761 = vmatprep.subr.mxu0 0.0
        %v762 = vand.u32 %v373, 4294901760
        %763 = vmatpush1.xpose.msra.mxu0 %v762
        %764 = vmatprep.subr.mxu0 0.0
        %v765 = vand.u32 %v374, 4294901760
        %766 = vmatpush1.xpose.msra.mxu0 %v765
        %767 = vmatprep.subr.mxu0 0.0
        %v768 = vand.u32 %v375, 4294901760
        %769 = vmatpush1.xpose.msra.mxu0 %v768
        %770 = vmatprep.subr.mxu0 0.0
        %771 = vmatpush1.xpose.msra.mxu0 0.0
        %772 = vmatprep.subr.mxu0 0.0
        %773 = vmatpush1.xpose.msra.mxu0 0.0
        %774 = vmatprep.subr.mxu0 0.0
        %775 = vmatpush1.xpose.msra.mxu0 0.0
        %776 = vmatprep.subr.mxu0 0.0
        %777 = vmatpush1.xpose.msra.mxu0 0.0
        %778 = vmatprep.subr.mxu0 0.0
        %779 = vmatpush1.xpose.msra.mxu0 0.0
        %780 = vmatprep.subr.mxu0 0.0
        %781 = vmatpush1.xpose.msra.mxu0 0.0
        %782 = vmatprep.subr.mxu0 0.0
        %783 = vmatpush1.xpose.msra.mxu0 0.0
        %784 = vmatprep.subr.mxu0 0.0
        %785 = vmatpush1.xpose.msra.mxu0 0.0
        %786 = vmatprep.subr.mxu0 0.0
        %787 = vmatpush1.xpose.msra.mxu0 0.0
        %788 = vmatprep.subr.mxu0 0.0
        %789 = vmatpush1.xpose.msra.mxu0 0.0
        %790 = vmatprep.subr.mxu0 0.0
        %791 = vmatpush1.xpose.msra.mxu0 0.0
        %792 = vmatprep.subr.mxu0 0.0
        %793 = vmatpush1.xpose.msra.mxu0 0.0
        %794 = vmatprep.subr.mxu0 0.0
        %795 = vmatpush1.xpose.msra.mxu0 0.0
        %796 = vmatprep.subr.mxu0 0.0
        %797 = vmatpush1.xpose.msra.mxu0 0.0
        %798 = vmatprep.subr.mxu0 0.0
        %799 = vmatpush1.xpose.msra.mxu0 0.0
        %800 = vmatprep.subr.mxu0 0.0
        %801 = vmatpush1.xpose.msra.mxu0 0.0
        %802 = vmatprep.mubr.f32.mxu0 0.0
        %v803 = vand.u32 %v279, 4294901760
        %v804 = vsub.f32 %v279, %v803
        %v805 = vand.u32 %v804, 4294901760
        %806 = vmatmul.mubr.f32.gmra.mrb[0].mxu0 %v805
        %v807 = vpop.f32.mrb[0].mxu0
        %v808 = vadd.f32 %v719, %v807
        %v809 = vpop.f32.mrb[0].mxu0
        %810 = vdwg.mxu0
        %811 = vmatprep.subr.mxu0 0.0
        %v812 = vand.u32 %v360, 4294901760
        %v813 = vsub.f32 %v360, %v812
        %v814 = vand.u32 %v813, 4294901760
        %815 = vmatpush1.xpose.msra.mxu0 %v814
        %816 = vmatprep.subr.mxu0 0.0
        %v817 = vand.u32 %v361, 4294901760
        %v818 = vsub.f32 %v361, %v817
        %v819 = vand.u32 %v818, 4294901760
        %820 = vmatpush1.xpose.msra.mxu0 %v819
        %821 = vmatprep.subr.mxu0 0.0
        %v822 = vand.u32 %v362, 4294901760
        %v823 = vsub.f32 %v362, %v822
        %v824 = vand.u32 %v823, 4294901760
        %825 = vmatpush1.xpose.msra.mxu0 %v824
        %826 = vmatprep.subr.mxu0 0.0
        %v827 = vand.u32 %v363, 4294901760
        %v828 = vsub.f32 %v363, %v827
        %v829 = vand.u32 %v828, 4294901760
        %830 = vmatpush1.xpose.msra.mxu0 %v829
        %831 = vmatprep.subr.mxu0 0.0
        %v832 = vand.u32 %v364, 4294901760
        %v833 = vsub.f32 %v364, %v832
        %v834 = vand.u32 %v833, 4294901760
        %835 = vmatpush1.xpose.msra.mxu0 %v834
        %836 = vmatprep.subr.mxu0 0.0
        %v837 = vand.u32 %v365, 4294901760
        %v838 = vsub.f32 %v365, %v837
        %v839 = vand.u32 %v838, 4294901760
        %840 = vmatpush1.xpose.msra.mxu0 %v839
        %841 = vmatprep.subr.mxu0 0.0
        %v842 = vand.u32 %v366, 4294901760
        %v843 = vsub.f32 %v366, %v842
        %v844 = vand.u32 %v843, 4294901760
        %845 = vmatpush1.xpose.msra.mxu0 %v844
        %846 = vmatprep.subr.mxu0 0.0
        %v847 = vand.u32 %v367, 4294901760
        %v848 = vsub.f32 %v367, %v847
        %v849 = vand.u32 %v848, 4294901760
        %850 = vmatpush1.xpose.msra.mxu0 %v849
        %851 = vmatprep.subr.mxu0 0.0
        %v852 = vand.u32 %v368, 4294901760
        %v853 = vsub.f32 %v368, %v852
        %v854 = vand.u32 %v853, 4294901760
        %855 = vmatpush1.xpose.msra.mxu0 %v854
        %856 = vmatprep.subr.mxu0 0.0
        %v857 = vand.u32 %v369, 4294901760
        %v858 = vsub.f32 %v369, %v857
        %v859 = vand.u32 %v858, 4294901760
        %860 = vmatpush1.xpose.msra.mxu0 %v859
        %861 = vmatprep.subr.mxu0 0.0
        %v862 = vand.u32 %v370, 4294901760
        %v863 = vsub.f32 %v370, %v862
        %v864 = vand.u32 %v863, 4294901760
        %865 = vmatpush1.xpose.msra.mxu0 %v864
        %866 = vmatprep.subr.mxu0 0.0
        %v867 = vand.u32 %v371, 4294901760
        %v868 = vsub.f32 %v371, %v867
        %v869 = vand.u32 %v868, 4294901760
        %870 = vmatpush1.xpose.msra.mxu0 %v869
        %871 = vmatprep.subr.mxu0 0.0
        %v872 = vand.u32 %v372, 4294901760
        %v873 = vsub.f32 %v372, %v872
        %v874 = vand.u32 %v873, 4294901760
        %875 = vmatpush1.xpose.msra.mxu0 %v874
        %876 = vmatprep.subr.mxu0 0.0
        %v877 = vand.u32 %v373, 4294901760
        %v878 = vsub.f32 %v373, %v877
        %v879 = vand.u32 %v878, 4294901760
        %880 = vmatpush1.xpose.msra.mxu0 %v879
        %881 = vmatprep.subr.mxu0 0.0
        %v882 = vand.u32 %v374, 4294901760
        %v883 = vsub.f32 %v374, %v882
        %v884 = vand.u32 %v883, 4294901760
        %885 = vmatpush1.xpose.msra.mxu0 %v884
        %886 = vmatprep.subr.mxu0 0.0
        %v887 = vand.u32 %v375, 4294901760
        %v888 = vsub.f32 %v375, %v887
        %v889 = vand.u32 %v888, 4294901760
        %890 = vmatpush1.xpose.msra.mxu0 %v889
        %891 = vmatprep.subr.mxu0 0.0
        %892 = vmatpush1.xpose.msra.mxu0 0.0
        %893 = vmatprep.subr.mxu0 0.0
        %894 = vmatpush1.xpose.msra.mxu0 0.0
        %895 = vmatprep.subr.mxu0 0.0
        %896 = vmatpush1.xpose.msra.mxu0 0.0
        %897 = vmatprep.subr.mxu0 0.0
        %898 = vmatpush1.xpose.msra.mxu0 0.0
        %899 = vmatprep.subr.mxu0 0.0
        %900 = vmatpush1.xpose.msra.mxu0 0.0
        %901 = vmatprep.subr.mxu0 0.0
        %902 = vmatpush1.xpose.msra.mxu0 0.0
        %903 = vmatprep.subr.mxu0 0.0
        %904 = vmatpush1.xpose.msra.mxu0 0.0
        %905 = vmatprep.subr.mxu0 0.0
        %906 = vmatpush1.xpose.msra.mxu0 0.0
        %907 = vmatprep.subr.mxu0 0.0
        %908 = vmatpush1.xpose.msra.mxu0 0.0
        %909 = vmatprep.subr.mxu0 0.0
        %910 = vmatpush1.xpose.msra.mxu0 0.0
        %911 = vmatprep.subr.mxu0 0.0
        %912 = vmatpush1.xpose.msra.mxu0 0.0
        %913 = vmatprep.subr.mxu0 0.0
        %914 = vmatpush1.xpose.msra.mxu0 0.0
        %915 = vmatprep.subr.mxu0 0.0
        %916 = vmatpush1.xpose.msra.mxu0 0.0
        %917 = vmatprep.subr.mxu0 0.0
        %918 = vmatpush1.xpose.msra.mxu0 0.0
        %919 = vmatprep.subr.mxu0 0.0
        %920 = vmatpush1.xpose.msra.mxu0 0.0
        %921 = vmatprep.subr.mxu0 0.0
        %922 = vmatpush1.xpose.msra.mxu0 0.0
        %923 = vmatprep.mubr.f32.mxu0 0.0
        %v924 = vand.u32 %v279, 4294901760
        %925 = vmatmul.mubr.f32.gmra.mrb[0].mxu0 %v924
        %v926 = vpop.f32.mrb[0].mxu0
        %v927 = vadd.f32 %v808, %v926
        %v928 = vpop.f32.mrb[0].mxu0
        %929 = vdwg.mxu0
        %930 = vmatprep.subr.mxu0 0.0
        %v931 = vand.u32 %v360, 4294901760
        %932 = vmatpush1.xpose.msra.mxu0 %v931
        %933 = vmatprep.subr.mxu0 0.0
        %v934 = vand.u32 %v361, 4294901760
        %935 = vmatpush1.xpose.msra.mxu0 %v934
        %936 = vmatprep.subr.mxu0 0.0
        %v937 = vand.u32 %v362, 4294901760
        %938 = vmatpush1.xpose.msra.mxu0 %v937
        %939 = vmatprep.subr.mxu0 0.0
        %v940 = vand.u32 %v363, 4294901760
        %941 = vmatpush1.xpose.msra.mxu0 %v940
        %942 = vmatprep.subr.mxu0 0.0
        %v943 = vand.u32 %v364, 4294901760
        %944 = vmatpush1.xpose.msra.mxu0 %v943
        %945 = vmatprep.subr.mxu0 0.0
        %v946 = vand.u32 %v365, 4294901760
        %947 = vmatpush1.xpose.msra.mxu0 %v946
        %948 = vmatprep.subr.mxu0 0.0
        %v949 = vand.u32 %v366, 4294901760
        %950 = vmatpush1.xpose.msra.mxu0 %v949
        %951 = vmatprep.subr.mxu0 0.0
        %v952 = vand.u32 %v367, 4294901760
        %953 = vmatpush1.xpose.msra.mxu0 %v952
        %954 = vmatprep.subr.mxu0 0.0
        %v955 = vand.u32 %v368, 4294901760
        %956 = vmatpush1.xpose.msra.mxu0 %v955
        %957 = vmatprep.subr.mxu0 0.0
        %v958 = vand.u32 %v369, 4294901760
        %959 = vmatpush1.xpose.msra.mxu0 %v958
        %960 = vmatprep.subr.mxu0 0.0
        %v961 = vand.u32 %v370, 4294901760
        %962 = vmatpush1.xpose.msra.mxu0 %v961
        %963 = vmatprep.subr.mxu0 0.0
        %v964 = vand.u32 %v371, 4294901760
        %965 = vmatpush1.xpose.msra.mxu0 %v964
        %966 = vmatprep.subr.mxu0 0.0
        %v967 = vand.u32 %v372, 4294901760
        %968 = vmatpush1.xpose.msra.mxu0 %v967
        %969 = vmatprep.subr.mxu0 0.0
        %v970 = vand.u32 %v373, 4294901760
        %971 = vmatpush1.xpose.msra.mxu0 %v970
        %972 = vmatprep.subr.mxu0 0.0
        %v973 = vand.u32 %v374, 4294901760
        %974 = vmatpush1.xpose.msra.mxu0 %v973
        %975 = vmatprep.subr.mxu0 0.0
        %v976 = vand.u32 %v375, 4294901760
        %977 = vmatpush1.xpose.msra.mxu0 %v976
        %978 = vmatprep.subr.mxu0 0.0
        %979 = vmatpush1.xpose.msra.mxu0 0.0
        %980 = vmatprep.subr.mxu0 0.0
        %981 = vmatpush1.xpose.msra.mxu0 0.0
        %982 = vmatprep.subr.mxu0 0.0
        %983 = vmatpush1.xpose.msra.mxu0 0.0
        %984 = vmatprep.subr.mxu0 0.0
        %985 = vmatpush1.xpose.msra.mxu0 0.0
        %986 = vmatprep.subr.mxu0 0.0
        %987 = vmatpush1.xpose.msra.mxu0 0.0
        %988 = vmatprep.subr.mxu0 0.0
        %989 = vmatpush1.xpose.msra.mxu0 0.0
        %990 = vmatprep.subr.mxu0 0.0
        %991 = vmatpush1.xpose.msra.mxu0 0.0
        %992 = vmatprep.subr.mxu0 0.0
        %993 = vmatpush1.xpose.msra.mxu0 0.0
        %994 = vmatprep.subr.mxu0 0.0
        %995 = vmatpush1.xpose.msra.mxu0 0.0
        %996 = vmatprep.subr.mxu0 0.0
        %997 = vmatpush1.xpose.msra.mxu0 0.0
        %998 = vmatprep.subr.mxu0 0.0
        %999 = vmatpush1.xpose.msra.mxu0 0.0
        %1000 = vmatprep.subr.mxu0 0.0
        %1001 = vmatpush1.xpose.msra.mxu0 0.0
        %1002 = vmatprep.subr.mxu0 0.0
        %1003 = vmatpush1.xpose.msra.mxu0 0.0
        %1004 = vmatprep.subr.mxu0 0.0
        %1005 = vmatpush1.xpose.msra.mxu0 0.0
        %1006 = vmatprep.subr.mxu0 0.0
        %1007 = vmatpush1.xpose.msra.mxu0 0.0
        %1008 = vmatprep.subr.mxu0 0.0
        %1009 = vmatpush1.xpose.msra.mxu0 0.0
        %1010 = vmatprep.mubr.f32.mxu0 0.0
        %v1011 = vand.u32 %v279, 4294901760
        %1012 = vmatmul.mubr.f32.gmra.mrb[0].mxu0 %v1011
        %v1013 = vpop.f32.mrb[0].mxu0
        %v1014 = vadd.f32 %v927, %v1013
        %v1015 = vpop.f32.mrb[0].mxu0
        %1016 = vdwg.mxu0
        %v1017 = vand.u32 2147483647, %v279
        %v1018 = vmul.f32 %v1017, 100.0
        %v1019 = vtanh.pop %v1018
        %v1020 = vmax.f32 %v1019, 1e-30
        %v1021 = vlog2.pop %v1020
        %v1022 = vmul.f32 %v1021, 0.6931472
        %1023 = vmatprep.subr.mxu0 0.0
        %v1024 = vand.u32 %v344, 4294901760
        %1025 = vmatpush1.xpose.msra.mxu0 %v1024
        %1026 = vmatprep.subr.mxu0 0.0
        %v1027 = vand.u32 %v345, 4294901760
        %1028 = vmatpush1.xpose.msra.mxu0 %v1027
        %1029 = vmatprep.subr.mxu0 0.0
        %v1030 = vand.u32 %v346, 4294901760
        %1031 = vmatpush1.xpose.msra.mxu0 %v1030
        %1032 = vmatprep.subr.mxu0 0.0
        %v1033 = vand.u32 %v347, 4294901760
        %1034 = vmatpush1.xpose.msra.mxu0 %v1033
        %1035 = vmatprep.subr.mxu0 0.0
        %v1036 = vand.u32 %v348, 4294901760
        %1037 = vmatpush1.xpose.msra.mxu0 %v1036
        %1038 = vmatprep.subr.mxu0 0.0
        %v1039 = vand.u32 %v349, 4294901760
        %1040 = vmatpush1.xpose.msra.mxu0 %v1039
        %1041 = vmatprep.subr.mxu0 0.0
        %v1042 = vand.u32 %v350, 4294901760
        %1043 = vmatpush1.xpose.msra.mxu0 %v1042
        %1044 = vmatprep.subr.mxu0 0.0
        %v1045 = vand.u32 %v351, 4294901760
        %1046 = vmatpush1.xpose.msra.mxu0 %v1045
        %1047 = vmatprep.subr.mxu0 0.0
        %v1048 = vand.u32 %v352, 4294901760
        %1049 = vmatpush1.xpose.msra.mxu0 %v1048
        %1050 = vmatprep.subr.mxu0 0.0
        %v1051 = vand.u32 %v353, 4294901760
        %1052 = vmatpush1.xpose.msra.mxu0 %v1051
        %1053 = vmatprep.subr.mxu0 0.0
        %v1054 = vand.u32 %v354, 4294901760
        %1055 = vmatpush1.xpose.msra.mxu0 %v1054
        %1056 = vmatprep.subr.mxu0 0.0
        %v1057 = vand.u32 %v355, 4294901760
        %1058 = vmatpush1.xpose.msra.mxu0 %v1057
        %1059 = vmatprep.subr.mxu0 0.0
        %v1060 = vand.u32 %v356, 4294901760
        %1061 = vmatpush1.xpose.msra.mxu0 %v1060
        %1062 = vmatprep.subr.mxu0 0.0
        %v1063 = vand.u32 %v357, 4294901760
        %1064 = vmatpush1.xpose.msra.mxu0 %v1063
        %1065 = vmatprep.subr.mxu0 0.0
        %v1066 = vand.u32 %v358, 4294901760
        %1067 = vmatpush1.xpose.msra.mxu0 %v1066
        %1068 = vmatprep.subr.mxu0 0.0
        %v1069 = vand.u32 %v359, 4294901760
        %1070 = vmatpush1.xpose.msra.mxu0 %v1069
        %1071 = vmatprep.subr.mxu0 0.0
        %1072 = vmatpush1.xpose.msra.mxu0 0.0
        %1073 = vmatprep.subr.mxu0 0.0
        %1074 = vmatpush1.xpose.msra.mxu0 0.0
        %1075 = vmatprep.subr.mxu0 0.0
        %1076 = vmatpush1.xpose.msra.mxu0 0.0
        %1077 = vmatprep.subr.mxu0 0.0
        %1078 = vmatpush1.xpose.msra.mxu0 0.0
        %1079 = vmatprep.subr.mxu0 0.0
        %1080 = vmatpush1.xpose.msra.mxu0 0.0
        %1081 = vmatprep.subr.mxu0 0.0
        %1082 = vmatpush1.xpose.msra.mxu0 0.0
        %1083 = vmatprep.subr.mxu0 0.0
        %1084 = vmatpush1.xpose.msra.mxu0 0.0
        %1085 = vmatprep.subr.mxu0 0.0
        %1086 = vmatpush1.xpose.msra.mxu0 0.0
        %1087 = vmatprep.subr.mxu0 0.0
        %1088 = vmatpush1.xpose.msra.mxu0 0.0
        %1089 = vmatprep.subr.mxu0 0.0
        %1090 = vmatpush1.xpose.msra.mxu0 0.0
        %1091 = vmatprep.subr.mxu0 0.0
        %1092 = vmatpush1.xpose.msra.mxu0 0.0
        %1093 = vmatprep.subr.mxu0 0.0
        %1094 = vmatpush1.xpose.msra.mxu0 0.0
        %1095 = vmatprep.subr.mxu0 0.0
        %1096 = vmatpush1.xpose.msra.mxu0 0.0
        %1097 = vmatprep.subr.mxu0 0.0
        %1098 = vmatpush1.xpose.msra.mxu0 0.0
        %1099 = vmatprep.subr.mxu0 0.0
        %1100 = vmatpush1.xpose.msra.mxu0 0.0
        %1101 = vmatprep.subr.mxu0 0.0
        %1102 = vmatpush1.xpose.msra.mxu0 0.0
        %1103 = vmatprep.mubr.f32.mxu0 0.0
        %v1104 = vand.u32 %v1022, 4294901760
        %v1105 = vsub.f32 %v1022, %v1104
        %v1106 = vand.u32 %v1105, 4294901760
        %v1107 = vsub.f32 %v1105, %v1106
        %v1108 = vand.u32 %v1107, 4294901760
        %1109 = vmatmul.mubr.f32.gmra.mrb[0].mxu0 %v1108
        %v1110 = vpop.f32.mrb[0].mxu0
        %v1111 = vadd.f32 0.0, %v1110
        %v1112 = vpop.f32.mrb[0].mxu0
        %1113 = vdwg.mxu0
        %1114 = vmatprep.subr.mxu0 0.0
        %v1115 = vand.u32 %v344, 4294901760
        %v1116 = vsub.f32 %v344, %v1115
        %v1117 = vand.u32 %v1116, 4294901760
        %v1118 = vsub.f32 %v1116, %v1117
        %v1119 = vand.u32 %v1118, 4294901760
        %1120 = vmatpush1.xpose.msra.mxu0 %v1119
        %1121 = vmatprep.subr.mxu0 0.0
        %v1122 = vand.u32 %v345, 4294901760
        %v1123 = vsub.f32 %v345, %v1122
        %v1124 = vand.u32 %v1123, 4294901760
        %v1125 = vsub.f32 %v1123, %v1124
        %v1126 = vand.u32 %v1125, 4294901760
        %1127 = vmatpush1.xpose.msra.mxu0 %v1126
        %1128 = vmatprep.subr.mxu0 0.0
        %v1129 = vand.u32 %v346, 4294901760
        %v1130 = vsub.f32 %v346, %v1129
        %v1131 = vand.u32 %v1130, 4294901760
        %v1132 = vsub.f32 %v1130, %v1131
        %v1133 = vand.u32 %v1132, 4294901760
        %1134 = vmatpush1.xpose.msra.mxu0 %v1133
        %1135 = vmatprep.subr.mxu0 0.0
        %v1136 = vand.u32 %v347, 4294901760
        %v1137 = vsub.f32 %v347, %v1136
        %v1138 = vand.u32 %v1137, 4294901760
        %v1139 = vsub.f32 %v1137, %v1138
        %v1140 = vand.u32 %v1139, 4294901760
        %1141 = vmatpush1.xpose.msra.mxu0 %v1140
        %1142 = vmatprep.subr.mxu0 0.0
        %v1143 = vand.u32 %v348, 4294901760
        %v1144 = vsub.f32 %v348, %v1143
        %v1145 = vand.u32 %v1144, 4294901760
        %v1146 = vsub.f32 %v1144, %v1145
        %v1147 = vand.u32 %v1146, 4294901760
        %1148 = vmatpush1.xpose.msra.mxu0 %v1147
        %1149 = vmatprep.subr.mxu0 0.0
        %v1150 = vand.u32 %v349, 4294901760
        %v1151 = vsub.f32 %v349, %v1150
        %v1152 = vand.u32 %v1151, 4294901760
        %v1153 = vsub.f32 %v1151, %v1152
        %v1154 = vand.u32 %v1153, 4294901760
        %1155 = vmatpush1.xpose.msra.mxu0 %v1154
        %1156 = vmatprep.subr.mxu0 0.0
        %v1157 = vand.u32 %v350, 4294901760
        %v1158 = vsub.f32 %v350, %v1157
        %v1159 = vand.u32 %v1158, 4294901760
        %v1160 = vsub.f32 %v1158, %v1159
        %v1161 = vand.u32 %v1160, 4294901760
        %1162 = vmatpush1.xpose.msra.mxu0 %v1161
        %1163 = vmatprep.subr.mxu0 0.0
        %v1164 = vand.u32 %v351, 4294901760
        %v1165 = vsub.f32 %v351, %v1164
        %v1166 = vand.u32 %v1165, 4294901760
        %v1167 = vsub.f32 %v1165, %v1166
        %v1168 = vand.u32 %v1167, 4294901760
        %1169 = vmatpush1.xpose.msra.mxu0 %v1168
        %1170 = vmatprep.subr.mxu0 0.0
        %v1171 = vand.u32 %v352, 4294901760
        %v1172 = vsub.f32 %v352, %v1171
        %v1173 = vand.u32 %v1172, 4294901760
        %v1174 = vsub.f32 %v1172, %v1173
        %v1175 = vand.u32 %v1174, 4294901760
        %1176 = vmatpush1.xpose.msra.mxu0 %v1175
        %1177 = vmatprep.subr.mxu0 0.0
        %v1178 = vand.u32 %v353, 4294901760
        %v1179 = vsub.f32 %v353, %v1178
        %v1180 = vand.u32 %v1179, 4294901760
        %v1181 = vsub.f32 %v1179, %v1180
        %v1182 = vand.u32 %v1181, 4294901760
        %1183 = vmatpush1.xpose.msra.mxu0 %v1182
        %1184 = vmatprep.subr.mxu0 0.0
        %v1185 = vand.u32 %v354, 4294901760
        %v1186 = vsub.f32 %v354, %v1185
        %v1187 = vand.u32 %v1186, 4294901760
        %v1188 = vsub.f32 %v1186, %v1187
        %v1189 = vand.u32 %v1188, 4294901760
        %1190 = vmatpush1.xpose.msra.mxu0 %v1189
        %1191 = vmatprep.subr.mxu0 0.0
        %v1192 = vand.u32 %v355, 4294901760
        %v1193 = vsub.f32 %v355, %v1192
        %v1194 = vand.u32 %v1193, 4294901760
        %v1195 = vsub.f32 %v1193, %v1194
        %v1196 = vand.u32 %v1195, 4294901760
        %1197 = vmatpush1.xpose.msra.mxu0 %v1196
        %1198 = vmatprep.subr.mxu0 0.0
        %v1199 = vand.u32 %v356, 4294901760
        %v1200 = vsub.f32 %v356, %v1199
        %v1201 = vand.u32 %v1200, 4294901760
        %v1202 = vsub.f32 %v1200, %v1201
        %v1203 = vand.u32 %v1202, 4294901760
        %1204 = vmatpush1.xpose.msra.mxu0 %v1203
        %1205 = vmatprep.subr.mxu0 0.0
        %v1206 = vand.u32 %v357, 4294901760
        %v1207 = vsub.f32 %v357, %v1206
        %v1208 = vand.u32 %v1207, 4294901760
        %v1209 = vsub.f32 %v1207, %v1208
        %v1210 = vand.u32 %v1209, 4294901760
        %1211 = vmatpush1.xpose.msra.mxu0 %v1210
        %1212 = vmatprep.subr.mxu0 0.0
        %v1213 = vand.u32 %v358, 4294901760
        %v1214 = vsub.f32 %v358, %v1213
        %v1215 = vand.u32 %v1214, 4294901760
        %v1216 = vsub.f32 %v1214, %v1215
        %v1217 = vand.u32 %v1216, 4294901760
        %1218 = vmatpush1.xpose.msra.mxu0 %v1217
        %1219 = vmatprep.subr.mxu0 0.0
        %v1220 = vand.u32 %v359, 4294901760
        %v1221 = vsub.f32 %v359, %v1220
        %v1222 = vand.u32 %v1221, 4294901760
        %v1223 = vsub.f32 %v1221, %v1222
        %v1224 = vand.u32 %v1223, 4294901760
        %1225 = vmatpush1.xpose.msra.mxu0 %v1224
        %1226 = vmatprep.subr.mxu0 0.0
        %1227 = vmatpush1.xpose.msra.mxu0 0.0
        %1228 = vmatprep.subr.mxu0 0.0
        %1229 = vmatpush1.xpose.msra.mxu0 0.0
        %1230 = vmatprep.subr.mxu0 0.0
        %1231 = vmatpush1.xpose.msra.mxu0 0.0
        %1232 = vmatprep.subr.mxu0 0.0
        %1233 = vmatpush1.xpose.msra.mxu0 0.0
        %1234 = vmatprep.subr.mxu0 0.0
        %1235 = vmatpush1.xpose.msra.mxu0 0.0
        %1236 = vmatprep.subr.mxu0 0.0
        %1237 = vmatpush1.xpose.msra.mxu0 0.0
        %1238 = vmatprep.subr.mxu0 0.0
        %1239 = vmatpush1.xpose.msra.mxu0 0.0
        %1240 = vmatprep.subr.mxu0 0.0
        %1241 = vmatpush1.xpose.msra.mxu0 0.0
        %1242 = vmatprep.subr.mxu0 0.0
        %1243 = vmatpush1.xpose.msra.mxu0 0.0
        %1244 = vmatprep.subr.mxu0 0.0
        %1245 = vmatpush1.xpose.msra.mxu0 0.0
        %1246 = vmatprep.subr.mxu0 0.0
        %1247 = vmatpush1.xpose.msra.mxu0 0.0
        %1248 = vmatprep.subr.mxu0 0.0
        %1249 = vmatpush1.xpose.msra.mxu0 0.0
        %1250 = vmatprep.subr.mxu0 0.0
        %1251 = vmatpush1.xpose.msra.mxu0 0.0
        %1252 = vmatprep.subr.mxu0 0.0
        %1253 = vmatpush1.xpose.msra.mxu0 0.0
        %1254 = vmatprep.subr.mxu0 0.0
        %1255 = vmatpush1.xpose.msra.mxu0 0.0
        %1256 = vmatprep.subr.mxu0 0.0
        %1257 = vmatpush1.xpose.msra.mxu0 0.0
        %1258 = vmatprep.mubr.f32.mxu0 0.0
        %v1259 = vand.u32 %v1022, 4294901760
        %1260 = vmatmul.mubr.f32.gmra.mrb[0].mxu0 %v1259
        %v1261 = vpop.f32.mrb[0].mxu0
        %v1262 = vadd.f32 %v1111, %v1261
        %v1263 = vpop.f32.mrb[0].mxu0
        %1264 = vdwg.mxu0
        %1265 = vmatprep.subr.mxu0 0.0
        %v1266 = vand.u32 %v344, 4294901760
        %v1267 = vsub.f32 %v344, %v1266
        %1268 = vmatpush1.xpose.msra.mxu0 %v1267
        %1269 = vmatprep.subr.mxu0 0.0
        %v1270 = vand.u32 %v345, 4294901760
        %v1271 = vsub.f32 %v345, %v1270
        %1272 = vmatpush1.xpose.msra.mxu0 %v1271
        %1273 = vmatprep.subr.mxu0 0.0
        %v1274 = vand.u32 %v346, 4294901760
        %v1275 = vsub.f32 %v346, %v1274
        %1276 = vmatpush1.xpose.msra.mxu0 %v1275
        %1277 = vmatprep.subr.mxu0 0.0
        %v1278 = vand.u32 %v347, 4294901760
        %v1279 = vsub.f32 %v347, %v1278
        %1280 = vmatpush1.xpose.msra.mxu0 %v1279
        %1281 = vmatprep.subr.mxu0 0.0
        %v1282 = vand.u32 %v348, 4294901760
        %v1283 = vsub.f32 %v348, %v1282
        %1284 = vmatpush1.xpose.msra.mxu0 %v1283
        %1285 = vmatprep.subr.mxu0 0.0
        %v1286 = vand.u32 %v349, 4294901760
        %v1287 = vsub.f32 %v349, %v1286
        %1288 = vmatpush1.xpose.msra.mxu0 %v1287
        %1289 = vmatprep.subr.mxu0 0.0
        %v1290 = vand.u32 %v350, 4294901760
        %v1291 = vsub.f32 %v350, %v1290
        %1292 = vmatpush1.xpose.msra.mxu0 %v1291
        %1293 = vmatprep.subr.mxu0 0.0
        %v1294 = vand.u32 %v351, 4294901760
        %v1295 = vsub.f32 %v351, %v1294
        %1296 = vmatpush1.xpose.msra.mxu0 %v1295
        %1297 = vmatprep.subr.mxu0 0.0
        %v1298 = vand.u32 %v352, 4294901760
        %v1299 = vsub.f32 %v352, %v1298
        %1300 = vmatpush1.xpose.msra.mxu0 %v1299
        %1301 = vmatprep.subr.mxu0 0.0
        %v1302 = vand.u32 %v353, 4294901760
        %v1303 = vsub.f32 %v353, %v1302
        %1304 = vmatpush1.xpose.msra.mxu0 %v1303
        %1305 = vmatprep.subr.mxu0 0.0
        %v1306 = vand.u32 %v354, 4294901760
        %v1307 = vsub.f32 %v354, %v1306
        %1308 = vmatpush1.xpose.msra.mxu0 %v1307
        %1309 = vmatprep.subr.mxu0 0.0
        %v1310 = vand.u32 %v355, 4294901760
        %v1311 = vsub.f32 %v355, %v1310
        %1312 = vmatpush1.xpose.msra.mxu0 %v1311
        %1313 = vmatprep.subr.mxu0 0.0
        %v1314 = vand.u32 %v356, 4294901760
        %v1315 = vsub.f32 %v356, %v1314
        %1316 = vmatpush1.xpose.msra.mxu0 %v1315
        %1317 = vmatprep.subr.mxu0 0.0
        %v1318 = vand.u32 %v357, 4294901760
        %v1319 = vsub.f32 %v357, %v1318
        %1320 = vmatpush1.xpose.msra.mxu0 %v1319
        %1321 = vmatprep.subr.mxu0 0.0
        %v1322 = vand.u32 %v358, 4294901760
        %v1323 = vsub.f32 %v358, %v1322
        %1324 = vmatpush1.xpose.msra.mxu0 %v1323
        %1325 = vmatprep.subr.mxu0 0.0
        %v1326 = vand.u32 %v359, 4294901760
        %v1327 = vsub.f32 %v359, %v1326
        %1328 = vmatpush1.xpose.msra.mxu0 %v1327
        %1329 = vmatprep.subr.mxu0 0.0
        %1330 = vmatpush1.xpose.msra.mxu0 0.0
        %1331 = vmatprep.subr.mxu0 0.0
        %1332 = vmatpush1.xpose.msra.mxu0 0.0
        %1333 = vmatprep.subr.mxu0 0.0
        %1334 = vmatpush1.xpose.msra.mxu0 0.0
        %1335 = vmatprep.subr.mxu0 0.0
        %1336 = vmatpush1.xpose.msra.mxu0 0.0
        %1337 = vmatprep.subr.mxu0 0.0
        %1338 = vmatpush1.xpose.msra.mxu0 0.0
        %1339 = vmatprep.subr.mxu0 0.0
        %1340 = vmatpush1.xpose.msra.mxu0 0.0
        %1341 = vmatprep.subr.mxu0 0.0
        %1342 = vmatpush1.xpose.msra.mxu0 0.0
        %1343 = vmatprep.subr.mxu0 0.0
        %1344 = vmatpush1.xpose.msra.mxu0 0.0
        %1345 = vmatprep.subr.mxu0 0.0
        %1346 = vmatpush1.xpose.msra.mxu0 0.0
        %1347 = vmatprep.subr.mxu0 0.0
        %1348 = vmatpush1.xpose.msra.mxu0 0.0
        %1349 = vmatprep.subr.mxu0 0.0
        %1350 = vmatpush1.xpose.msra.mxu0 0.0
        %1351 = vmatprep.subr.mxu0 0.0
        %1352 = vmatpush1.xpose.msra.mxu0 0.0
        %1353 = vmatprep.subr.mxu0 0.0
        %1354 = vmatpush1.xpose.msra.mxu0 0.0
        %1355 = vmatprep.subr.mxu0 0.0
        %1356 = vmatpush1.xpose.msra.mxu0 0.0
        %1357 = vmatprep.subr.mxu0 0.0
        %1358 = vmatpush1.xpose.msra.mxu0 0.0
        %1359 = vmatprep.subr.mxu0 0.0
        %1360 = vmatpush1.xpose.msra.mxu0 0.0
        %1361 = vmatprep.mubr.f32.mxu0 0.0
        %v1362 = vand.u32 %v1022, 4294901760
        %v1363 = vsub.f32 %v1022, %v1362
        %1364 = vmatmul.mubr.f32.gmra.mrb[0].mxu0 %v1363
        %v1365 = vpop.f32.mrb[0].mxu0
        %v1366 = vadd.f32 %v1262, %v1365
        %v1367 = vpop.f32.mrb[0].mxu0
        %1368 = vdwg.mxu0
        %1369 = vmatprep.subr.mxu0 0.0
        %v1370 = vand.u32 %v344, 4294901760
        %1371 = vmatpush1.xpose.msra.mxu0 %v1370
        %1372 = vmatprep.subr.mxu0 0.0
        %v1373 = vand.u32 %v345, 4294901760
        %1374 = vmatpush1.xpose.msra.mxu0 %v1373
        %1375 = vmatprep.subr.mxu0 0.0
        %v1376 = vand.u32 %v346, 4294901760
        %1377 = vmatpush1.xpose.msra.mxu0 %v1376
        %1378 = vmatprep.subr.mxu0 0.0
        %v1379 = vand.u32 %v347, 4294901760
        %1380 = vmatpush1.xpose.msra.mxu0 %v1379
        %1381 = vmatprep.subr.mxu0 0.0
        %v1382 = vand.u32 %v348, 4294901760
        %1383 = vmatpush1.xpose.msra.mxu0 %v1382
        %1384 = vmatprep.subr.mxu0 0.0
        %v1385 = vand.u32 %v349, 4294901760
        %1386 = vmatpush1.xpose.msra.mxu0 %v1385
        %1387 = vmatprep.subr.mxu0 0.0
        %v1388 = vand.u32 %v350, 4294901760
        %1389 = vmatpush1.xpose.msra.mxu0 %v1388
        %1390 = vmatprep.subr.mxu0 0.0
        %v1391 = vand.u32 %v351, 4294901760
        %1392 = vmatpush1.xpose.msra.mxu0 %v1391
        %1393 = vmatprep.subr.mxu0 0.0
        %v1394 = vand.u32 %v352, 4294901760
        %1395 = vmatpush1.xpose.msra.mxu0 %v1394
        %1396 = vmatprep.subr.mxu0 0.0
        %v1397 = vand.u32 %v353, 4294901760
        %1398 = vmatpush1.xpose.msra.mxu0 %v1397
        %1399 = vmatprep.subr.mxu0 0.0
        %v1400 = vand.u32 %v354, 4294901760
        %1401 = vmatpush1.xpose.msra.mxu0 %v1400
        %1402 = vmatprep.subr.mxu0 0.0
        %v1403 = vand.u32 %v355, 4294901760
        %1404 = vmatpush1.xpose.msra.mxu0 %v1403
        %1405 = vmatprep.subr.mxu0 0.0
        %v1406 = vand.u32 %v356, 4294901760
        %1407 = vmatpush1.xpose.msra.mxu0 %v1406
        %1408 = vmatprep.subr.mxu0 0.0
        %v1409 = vand.u32 %v357, 4294901760
        %1410 = vmatpush1.xpose.msra.mxu0 %v1409
        %1411 = vmatprep.subr.mxu0 0.0
        %v1412 = vand.u32 %v358, 4294901760
        %1413 = vmatpush1.xpose.msra.mxu0 %v1412
        %1414 = vmatprep.subr.mxu0 0.0
        %v1415 = vand.u32 %v359, 4294901760
        %1416 = vmatpush1.xpose.msra.mxu0 %v1415
        %1417 = vmatprep.subr.mxu0 0.0
        %1418 = vmatpush1.xpose.msra.mxu0 0.0
        %1419 = vmatprep.subr.mxu0 0.0
        %1420 = vmatpush1.xpose.msra.mxu0 0.0
        %1421 = vmatprep.subr.mxu0 0.0
        %1422 = vmatpush1.xpose.msra.mxu0 0.0
        %1423 = vmatprep.subr.mxu0 0.0
        %1424 = vmatpush1.xpose.msra.mxu0 0.0
        %1425 = vmatprep.subr.mxu0 0.0
        %1426 = vmatpush1.xpose.msra.mxu0 0.0
        %1427 = vmatprep.subr.mxu0 0.0
        %1428 = vmatpush1.xpose.msra.mxu0 0.0
        %1429 = vmatprep.subr.mxu0 0.0
        %1430 = vmatpush1.xpose.msra.mxu0 0.0
        %1431 = vmatprep.subr.mxu0 0.0
        %1432 = vmatpush1.xpose.msra.mxu0 0.0
        %1433 = vmatprep.subr.mxu0 0.0
        %1434 = vmatpush1.xpose.msra.mxu0 0.0
        %1435 = vmatprep.subr.mxu0 0.0
        %1436 = vmatpush1.xpose.msra.mxu0 0.0
        %1437 = vmatprep.subr.mxu0 0.0
        %1438 = vmatpush1.xpose.msra.mxu0 0.0
        %1439 = vmatprep.subr.mxu0 0.0
        %1440 = vmatpush1.xpose.msra.mxu0 0.0
        %1441 = vmatprep.subr.mxu0 0.0
        %1442 = vmatpush1.xpose.msra.mxu0 0.0
        %1443 = vmatprep.subr.mxu0 0.0
        %1444 = vmatpush1.xpose.msra.mxu0 0.0
        %1445 = vmatprep.subr.mxu0 0.0
        %1446 = vmatpush1.xpose.msra.mxu0 0.0
        %1447 = vmatprep.subr.mxu0 0.0
        %1448 = vmatpush1.xpose.msra.mxu0 0.0
        %1449 = vmatprep.mubr.f32.mxu0 0.0
        %v1450 = vand.u32 %v1022, 4294901760
        %v1451 = vsub.f32 %v1022, %v1450
        %v1452 = vand.u32 %v1451, 4294901760
        %1453 = vmatmul.mubr.f32.gmra.mrb[0].mxu0 %v1452
        %v1454 = vpop.f32.mrb[0].mxu0
        %v1455 = vadd.f32 %v1366, %v1454
        %v1456 = vpop.f32.mrb[0].mxu0
        %1457 = vdwg.mxu0
        %1458 = vmatprep.subr.mxu0 0.0
        %v1459 = vand.u32 %v344, 4294901760
        %v1460 = vsub.f32 %v344, %v1459
        %v1461 = vand.u32 %v1460, 4294901760
        %1462 = vmatpush1.xpose.msra.mxu0 %v1461
        %1463 = vmatprep.subr.mxu0 0.0
        %v1464 = vand.u32 %v345, 4294901760
        %v1465 = vsub.f32 %v345, %v1464
        %v1466 = vand.u32 %v1465, 4294901760
        %1467 = vmatpush1.xpose.msra.mxu0 %v1466
        %1468 = vmatprep.subr.mxu0 0.0
        %v1469 = vand.u32 %v346, 4294901760
        %v1470 = vsub.f32 %v346, %v1469
        %v1471 = vand.u32 %v1470, 4294901760
        %1472 = vmatpush1.xpose.msra.mxu0 %v1471
        %1473 = vmatprep.subr.mxu0 0.0
        %v1474 = vand.u32 %v347, 4294901760
        %v1475 = vsub.f32 %v347, %v1474
        %v1476 = vand.u32 %v1475, 4294901760
        %1477 = vmatpush1.xpose.msra.mxu0 %v1476
        %1478 = vmatprep.subr.mxu0 0.0
        %v1479 = vand.u32 %v348, 4294901760
        %v1480 = vsub.f32 %v348, %v1479
        %v1481 = vand.u32 %v1480, 4294901760
        %1482 = vmatpush1.xpose.msra.mxu0 %v1481
        %1483 = vmatprep.subr.mxu0 0.0
        %v1484 = vand.u32 %v349, 4294901760
        %v1485 = vsub.f32 %v349, %v1484
        %v1486 = vand.u32 %v1485, 4294901760
        %1487 = vmatpush1.xpose.msra.mxu0 %v1486
        %1488 = vmatprep.subr.mxu0 0.0
        %v1489 = vand.u32 %v350, 4294901760
        %v1490 = vsub.f32 %v350, %v1489
        %v1491 = vand.u32 %v1490, 4294901760
        %1492 = vmatpush1.xpose.msra.mxu0 %v1491
        %1493 = vmatprep.subr.mxu0 0.0
        %v1494 = vand.u32 %v351, 4294901760
        %v1495 = vsub.f32 %v351, %v1494
        %v1496 = vand.u32 %v1495, 4294901760
        %1497 = vmatpush1.xpose.msra.mxu0 %v1496
        %1498 = vmatprep.subr.mxu0 0.0
        %v1499 = vand.u32 %v352, 4294901760
        %v1500 = vsub.f32 %v352, %v1499
        %v1501 = vand.u32 %v1500, 4294901760
        %1502 = vmatpush1.xpose.msra.mxu0 %v1501
        %1503 = vmatprep.subr.mxu0 0.0
        %v1504 = vand.u32 %v353, 4294901760
        %v1505 = vsub.f32 %v353, %v1504
        %v1506 = vand.u32 %v1505, 4294901760
        %1507 = vmatpush1.xpose.msra.mxu0 %v1506
        %1508 = vmatprep.subr.mxu0 0.0
        %v1509 = vand.u32 %v354, 4294901760
        %v1510 = vsub.f32 %v354, %v1509
        %v1511 = vand.u32 %v1510, 4294901760
        %1512 = vmatpush1.xpose.msra.mxu0 %v1511
        %1513 = vmatprep.subr.mxu0 0.0
        %v1514 = vand.u32 %v355, 4294901760
        %v1515 = vsub.f32 %v355, %v1514
        %v1516 = vand.u32 %v1515, 4294901760
        %1517 = vmatpush1.xpose.msra.mxu0 %v1516
        %1518 = vmatprep.subr.mxu0 0.0
        %v1519 = vand.u32 %v356, 4294901760
        %v1520 = vsub.f32 %v356, %v1519
        %v1521 = vand.u32 %v1520, 4294901760
        %1522 = vmatpush1.xpose.msra.mxu0 %v1521
        %1523 = vmatprep.subr.mxu0 0.0
        %v1524 = vand.u32 %v357, 4294901760
        %v1525 = vsub.f32 %v357, %v1524
        %v1526 = vand.u32 %v1525, 4294901760
        %1527 = vmatpush1.xpose.msra.mxu0 %v1526
        %1528 = vmatprep.subr.mxu0 0.0
        %v1529 = vand.u32 %v358, 4294901760
        %v1530 = vsub.f32 %v358, %v1529
        %v1531 = vand.u32 %v1530, 4294901760
        %1532 = vmatpush1.xpose.msra.mxu0 %v1531
        %1533 = vmatprep.subr.mxu0 0.0
        %v1534 = vand.u32 %v359, 4294901760
        %v1535 = vsub.f32 %v359, %v1534
        %v1536 = vand.u32 %v1535, 4294901760
        %1537 = vmatpush1.xpose.msra.mxu0 %v1536
        %1538 = vmatprep.subr.mxu0 0.0
        %1539 = vmatpush1.xpose.msra.mxu0 0.0
        %1540 = vmatprep.subr.mxu0 0.0
        %1541 = vmatpush1.xpose.msra.mxu0 0.0
        %1542 = vmatprep.subr.mxu0 0.0
        %1543 = vmatpush1.xpose.msra.mxu0 0.0
        %1544 = vmatprep.subr.mxu0 0.0
        %1545 = vmatpush1.xpose.msra.mxu0 0.0
        %1546 = vmatprep.subr.mxu0 0.0
        %1547 = vmatpush1.xpose.msra.mxu0 0.0
        %1548 = vmatprep.subr.mxu0 0.0
        %1549 = vmatpush1.xpose.msra.mxu0 0.0
        %1550 = vmatprep.subr.mxu0 0.0
        %1551 = vmatpush1.xpose.msra.mxu0 0.0
        %1552 = vmatprep.subr.mxu0 0.0
        %1553 = vmatpush1.xpose.msra.mxu0 0.0
        %1554 = vmatprep.subr.mxu0 0.0
        %1555 = vmatpush1.xpose.msra.mxu0 0.0
        %1556 = vmatprep.subr.mxu0 0.0
        %1557 = vmatpush1.xpose.msra.mxu0 0.0
        %1558 = vmatprep.subr.mxu0 0.0
        %1559 = vmatpush1.xpose.msra.mxu0 0.0
        %1560 = vmatprep.subr.mxu0 0.0
        %1561 = vmatpush1.xpose.msra.mxu0 0.0
        %1562 = vmatprep.subr.mxu0 0.0
        %1563 = vmatpush1.xpose.msra.mxu0 0.0
        %1564 = vmatprep.subr.mxu0 0.0
        %1565 = vmatpush1.xpose.msra.mxu0 0.0
        %1566 = vmatprep.subr.mxu0 0.0
        %1567 = vmatpush1.xpose.msra.mxu0 0.0
        %1568 = vmatprep.subr.mxu0 0.0
        %1569 = vmatpush1.xpose.msra.mxu0 0.0
        %1570 = vmatprep.mubr.f32.mxu0 0.0
        %v1571 = vand.u32 %v1022, 4294901760
        %1572 = vmatmul.mubr.f32.gmra.mrb[0].mxu0 %v1571
        %v1573 = vpop.f32.mrb[0].mxu0
        %v1574 = vadd.f32 %v1455, %v1573
        %v1575 = vpop.f32.mrb[0].mxu0
        %1576 = vdwg.mxu0
        %1577 = vmatprep.subr.mxu0 0.0
        %v1578 = vand.u32 %v344, 4294901760
        %1579 = vmatpush1.xpose.msra.mxu0 %v1578
        %1580 = vmatprep.subr.mxu0 0.0
        %v1581 = vand.u32 %v345, 4294901760
        %1582 = vmatpush1.xpose.msra.mxu0 %v1581
        %1583 = vmatprep.subr.mxu0 0.0
        %v1584 = vand.u32 %v346, 4294901760
        %1585 = vmatpush1.xpose.msra.mxu0 %v1584
        %1586 = vmatprep.subr.mxu0 0.0
        %v1587 = vand.u32 %v347, 4294901760
        %1588 = vmatpush1.xpose.msra.mxu0 %v1587
        %1589 = vmatprep.subr.mxu0 0.0
        %v1590 = vand.u32 %v348, 4294901760
        %1591 = vmatpush1.xpose.msra.mxu0 %v1590
        %1592 = vmatprep.subr.mxu0 0.0
        %v1593 = vand.u32 %v349, 4294901760
        %1594 = vmatpush1.xpose.msra.mxu0 %v1593
        %1595 = vmatprep.subr.mxu0 0.0
        %v1596 = vand.u32 %v350, 4294901760
        %1597 = vmatpush1.xpose.msra.mxu0 %v1596
        %1598 = vmatprep.subr.mxu0 0.0
        %v1599 = vand.u32 %v351, 4294901760
        %1600 = vmatpush1.xpose.msra.mxu0 %v1599
        %1601 = vmatprep.subr.mxu0 0.0
        %v1602 = vand.u32 %v352, 4294901760
        %1603 = vmatpush1.xpose.msra.mxu0 %v1602
        %1604 = vmatprep.subr.mxu0 0.0
        %v1605 = vand.u32 %v353, 4294901760
        %1606 = vmatpush1.xpose.msra.mxu0 %v1605
        %1607 = vmatprep.subr.mxu0 0.0
        %v1608 = vand.u32 %v354, 4294901760
        %1609 = vmatpush1.xpose.msra.mxu0 %v1608
        %1610 = vmatprep.subr.mxu0 0.0
        %v1611 = vand.u32 %v355, 4294901760
        %1612 = vmatpush1.xpose.msra.mxu0 %v1611
        %1613 = vmatprep.subr.mxu0 0.0
        %v1614 = vand.u32 %v356, 4294901760
        %1615 = vmatpush1.xpose.msra.mxu0 %v1614
        %1616 = vmatprep.subr.mxu0 0.0
        %v1617 = vand.u32 %v357, 4294901760
        %1618 = vmatpush1.xpose.msra.mxu0 %v1617
        %1619 = vmatprep.subr.mxu0 0.0
        %v1620 = vand.u32 %v358, 4294901760
        %1621 = vmatpush1.xpose.msra.mxu0 %v1620
        %1622 = vmatprep.subr.mxu0 0.0
        %v1623 = vand.u32 %v359, 4294901760
        %1624 = vmatpush1.xpose.msra.mxu0 %v1623
        %1625 = vmatprep.subr.mxu0 0.0
        %1626 = vmatpush1.xpose.msra.mxu0 0.0
        %1627 = vmatprep.subr.mxu0 0.0
        %1628 = vmatpush1.xpose.msra.mxu0 0.0
        %1629 = vmatprep.subr.mxu0 0.0
        %1630 = vmatpush1.xpose.msra.mxu0 0.0
        %1631 = vmatprep.subr.mxu0 0.0
        %1632 = vmatpush1.xpose.msra.mxu0 0.0
        %1633 = vmatprep.subr.mxu0 0.0
        %1634 = vmatpush1.xpose.msra.mxu0 0.0
        %1635 = vmatprep.subr.mxu0 0.0
        %1636 = vmatpush1.xpose.msra.mxu0 0.0
        %1637 = vmatprep.subr.mxu0 0.0
        %1638 = vmatpush1.xpose.msra.mxu0 0.0
        %1639 = vmatprep.subr.mxu0 0.0
        %1640 = vmatpush1.xpose.msra.mxu0 0.0
        %1641 = vmatprep.subr.mxu0 0.0
        %1642 = vmatpush1.xpose.msra.mxu0 0.0
        %1643 = vmatprep.subr.mxu0 0.0
        %1644 = vmatpush1.xpose.msra.mxu0 0.0
        %1645 = vmatprep.subr.mxu0 0.0
        %1646 = vmatpush1.xpose.msra.mxu0 0.0
        %1647 = vmatprep.subr.mxu0 0.0
        %1648 = vmatpush1.xpose.msra.mxu0 0.0
        %1649 = vmatprep.subr.mxu0 0.0
        %1650 = vmatpush1.xpose.msra.mxu0 0.0
        %1651 = vmatprep.subr.mxu0 0.0
        %1652 = vmatpush1.xpose.msra.mxu0 0.0
        %1653 = vmatprep.subr.mxu0 0.0
        %1654 = vmatpush1.xpose.msra.mxu0 0.0
        %1655 = vmatprep.subr.mxu0 0.0
        %1656 = vmatpush1.xpose.msra.mxu0 0.0
        %1657 = vmatprep.mubr.f32.mxu0 0.0
        %v1658 = vand.u32 %v1022, 4294901760
        %1659 = vmatmul.mubr.f32.gmra.mrb[0].mxu0 %v1658
        %v1660 = vpop.f32.mrb[0].mxu0
        %v1661 = vadd.f32 %v1574, %v1660
        %v1662 = vpop.f32.mrb[0].mxu0
        %1663 = vdwg.mxu0
        %v1664 = vmul.f32 %v1661, 1.442695
        %v1665 = vpow.pop %v1664
        %v1666 = vmul.f32 %v1014, %v1665
        %v1667 = vmax.f32 %v1666, 0.0
        %1668 = vst [vmem:[%s269] sm:$0xff] %v1667
        %1669 = vst [vmem:[%s276] sm:$0xff] %v1665
        %s1670 = sand.u32 %s107, 1
        %s1671 = scalar_lea.sflag [#allocation4], %s1670
        %s1672 = sand.u32 %s107, 1
        %s1673 = smul.addr %s1672, 8
        %s1674 = scalar_lea.vmem [#allocation8], %s1673
        %s1675 = sand.u32 %s133, 1
        %s1676 = scalar_lea.sflag [#allocation10], %s1675
        %s1677 = sand.u32 %s133, 1
        %s1678 = smul.addr %s1677, 8
        %s1679 = scalar_lea.vmem [#allocation9], %s1678
        // Predicated region
        $region45: #{tpu_custom_call.1} parent=31 // pred_check
          %p1680 = pneg %p117
        $region46: #{tpu_custom_call.1} parent=31 // pred_check_branch
          %1682 = sbr.rel (%p1680) target = $region48
        $region47: #{tpu_custom_call.1} parent=31 // pred_region
          %s1684 = ssub.s32 128, 128
          %1685 = vsyncadd %s1671, %s1684
          %s1686 = smul.addr %s26, 128
          %s1687 = scalar_lea.hbm %s3, %s1686
          %s1689 = sshll.u32 %s1674, 4
          %s1690 = int_to_ptr.vmem [resolvable:$true] %s1689
          %1692 = dma.vmem_to_hbm [thread:$0]  %s1690, 128, %s1687, %s1671
        $region48: #{tpu_custom_call.1} parent=31 // pred_fallthru
          _
        // Predicated region
        $region49: #{tpu_custom_call.1} parent=31 // pred_check
          %p1693 = pneg %p143
        $region50: #{tpu_custom_call.1} parent=31 // pred_check_branch
          %1695 = sbr.rel (%p1693) target = $region52
        $region51: #{tpu_custom_call.1} parent=31 // pred_region
          %s1697 = ssub.s32 128, 128
          %1698 = vsyncadd %s1676, %s1697
          %s1699 = smul.addr %s26, 128
          %s1700 = scalar_lea.hbm %s4, %s1699
          %s1702 = sshll.u32 %s1679, 4
          %s1703 = int_to_ptr.vmem [resolvable:$true] %s1702
          %1705 = dma.vmem_to_hbm [thread:$0]  %s1703, 128, %s1700, %s1676
        $region52: #{tpu_custom_call.1} parent=31 // pred_fallthru
          _
      $region32: #{tpu_custom_call.1} parent=5 // pred_fallthru
        _
      %p1706 = scmp.le.s32.totalorder 2, %s21
      // Predicated region
      $region53: #{tpu_custom_call.1} parent=5 // pred_check
        %p1707 = pneg %p1706
      $region54: #{tpu_custom_call.1} parent=5 // pred_check_branch
        %1709 = sbr.rel (%p1707) target = $region56
      $region55: #{tpu_custom_call.1} parent=5 // pred_region
        %s1710 = ssub.s32 %s21, 2
        // Predicated region
        $region57: #{tpu_custom_call.1} parent=55 // pred_check
          %p1711 = pneg %p123
        $region58: #{tpu_custom_call.1} parent=55 // pred_check_branch
          %1713 = sbr.rel (%p1711) target = $region60
        $region59: #{tpu_custom_call.1} parent=55 // pred_region
          %s1714 = sand.u32 %s108, 1
          %s1715 = scalar_lea.sflag [#allocation4], %s1714
          %s1716 = sand.u32 %s108, 1
          %s1717 = smul.addr %s1716, 8
          %s1718 = scalar_lea.vmem [#allocation8], %s1717
          %1719 = dma.done %s1715, 128
        $region60: #{tpu_custom_call.1} parent=55 // pred_fallthru
          _
        // Predicated region
        $region61: #{tpu_custom_call.1} parent=55 // pred_check
          %p1720 = pneg %p149
        $region62: #{tpu_custom_call.1} parent=55 // pred_check_branch
          %1722 = sbr.rel (%p1720) target = $region64
        $region63: #{tpu_custom_call.1} parent=55 // pred_region
          %s1723 = sand.u32 %s134, 1
          %s1724 = scalar_lea.sflag [#allocation10], %s1723
          %s1725 = sand.u32 %s134, 1
          %s1726 = smul.addr %s1725, 8
          %s1727 = scalar_lea.vmem [#allocation9], %s1726
          %1728 = dma.done %s1724, 128
        $region64: #{tpu_custom_call.1} parent=55 // pred_fallthru
          _
      $region56: #{tpu_custom_call.1} parent=5 // pred_fallthru
        _
    $region6: #{tpu_custom_call.1} parent=1 // loop_footer
      %s25 = sadd.s32 1, %s21
    $region7: #{tpu_custom_call.1} parent=1 // loop_footer_branch
      %20 = sbr.rel target = $region3
    $region8: #{tpu_custom_call.1} parent=1 // loop_exit
      _
    %1729 = vsyncpa [#allocation3], 1
    %s1730 = scalar_lea.sflag [#allocation3], 1
    %1731 = vsyncpa %s1730, 1
    %1732 = vsyncpa [#allocation6], 1
    %s1733 = scalar_lea.sflag [#allocation6], 1
    %1734 = vsyncpa %s1733, 1
    %1735 = vsyncpa [#allocation4], 1
    %s1736 = scalar_lea.sflag [#allocation4], 1
    %1737 = vsyncpa %s1736, 1
    %1738 = vsyncpa [#allocation10], 1
    %s1739 = scalar_lea.sflag [#allocation10], 1
    %1740 = vsyncpa %s1739, 1

</llo_original>
